<compile_context>
chip_gen: v7x
topology: tpu7x:2x2x1
jax: 0.10.0
libtpu: 0.0.40
codegen_flags: <defaults>
</compile_context>

<pallas_src>
import functools

import numpy as np
import jax
import jax.numpy as jnp
from jax import lax
from jax.experimental import pallas as pl
from jax.experimental.pallas import tpu as pltpu  # noqa: F401  (kept for TPU backend)


HID = 200       # reference MLP hidden width
HID_PAD = 256   # padded to a lane-dense multiple of 128


# ------------------------------- mega kernel --------------------------------

def _mega_kernel(
        # ---- inputs ----
        user_ref, origin_ref, tran_ref, loc_ref, inv_ref, acc_ref, delta_ref,
        tim1_ref, tim_ref,
        user2_ref, p2o_ref, p2t_row_ref,
        u1_ref, sim_ref,
        pois_ref, rs_ref,
        wa_ref, wd_ref, wi_ref, w2_ref, wo_ref, b1_ref, b2_ref, bo_ref,
        # ---- outputs ----
        score_ref, score3_ref, score4_ref, sim_score_ref,
        reg_origin_ref, reg_tran_ref, reg_acc_ref, reg_inv_ref, reg_loc_ref,
        reg_delta_ref, reg_tim1_ref, reg_tim_ref,
        eng1_ref, eng2_ref,
        *, rank, test_transition):
    r = rank
    f32 = jnp.float32
    bf16 = jnp.bfloat16

    # ---- user-orthogonal projections (VPU) ----
    u = user_ref[...]                                       # (B, 2R)

    def proj(e):
        return e - u * jnp.sum(u * e, axis=1, keepdims=True)

    origin_p = proj(origin_ref[...])
    tran_p = proj(tran_ref[...])
    loc_p = proj(loc_ref[...])
    inv_p = proj(inv_ref[...])
    acc_p = proj(acc_ref[...])
    delta_p = proj(delta_ref[...])
    tim1_p = proj(tim1_ref[...])
    tim_p = proj(tim_ref[...])

    u2 = user2_ref[...]                                     # (P, 2R)

    def proj2(e):
        return e - u2 * jnp.sum(u2 * e, axis=1, keepdims=True)

    p2o_p = proj2(p2o_ref[...])                             # (P, 2R)
    p2t_p = proj2(p2t_row_ref[...])                         # (1,2R) -> (P,2R) broadcast

    # ---- sqrt regularizers (f32) ----
    def regf(p):
        return jnp.sqrt(p[:, :r] ** 2 + p[:, r:] ** 2)

    reg_origin_ref[...] = regf(origin_p)
    reg_tran_ref[...] = regf(tran_p)
    reg_acc_ref[...] = regf(acc_p)
    reg_inv_ref[...] = regf(inv_p)
    reg_loc_ref[...] = regf(loc_p)
    reg_delta_ref[...] = regf(delta_p)
    reg_tim1_ref[...] = regf(tim1_p)
    reg_tim_ref[...] = regf(tim_p)

    # ---- path MLPs: real|imag lanes computed together via block-diag weights
    # h_cat = relu(acc_p@Wa + delta_p@Wd + inv_p@Wi + b1cat)   (B, 2*HID_PAD)
    # rel1  = h_cat @ Wout_blk + bout_cat                      (B, 2R)
    h1 = jnp.dot(acc_p, wa_ref[...], preferred_element_type=f32)
    h1 = h1 + jnp.dot(delta_p, wd_ref[...], preferred_element_type=f32)
    h1 = h1 + jnp.dot(inv_p, wi_ref[...], preferred_element_type=f32)
    h1 = jnp.maximum(h1 + b1_ref[...], 0.0)
    rel1 = jnp.dot(h1, wo_ref[...], preferred_element_type=f32) + bo_ref[...]

    h2 = jnp.dot(p2t_p, w2_ref[...], preferred_element_type=f32)
    h2 = jnp.maximum(h2 + b2_ref[...], 0.0)
    rel2 = jnp.dot(h2, wo_ref[...], preferred_element_type=f32) + bo_ref[...]

    # ---- eng1 / eng2 (f32) ----
    def eng(d):
        e = jnp.sqrt(d[:, :r] ** 2 + d[:, r:] ** 2)
        s = jnp.sum(jnp.sum(e, axis=1, keepdims=True), axis=0, keepdims=True)
        return 0.5 * s                                        # (1, 1)

    eng1_ref[...] = eng(rel1 - tran_p)
    eng2_ref[...] = eng(rel2 - p2t_p)

    # ---- projected ComplEx scores:  q.(p - (u.p)u) = q.p - (u.p)(q.u) ----
    def cmul(a, b):
        a0, a1 = a[:, :r], a[:, r:]
        b0, b1 = b[:, :r], b[:, r:]
        return jnp.concatenate([a0 * b0 - a1 * b1, a0 * b1 + a1 * b0], axis=1)

    if test_transition:
        q1 = cmul(origin_p, tran_p)
    else:
        q1 = cmul(tim_p, inv_p)
    q3 = cmul(origin_p, rel1)
    q4 = cmul(p2o_p, rel2)

    q_all = jnp.concatenate([q1, q3, q4], axis=0)            # (2B+P, 2R)
    u_all = jnp.concatenate([u, u, u2], axis=0)              # (2B+P, 2R)
    pois = pois_ref[...]                                     # (n_loc, 2R)
    cdims = (((1,), (1,)), ((), ()))
    s_all = lax.dot_general(q_all.astype(bf16), pois.astype(bf16), cdims,
                            preferred_element_type=f32)
    t_all = lax.dot_general(u_all.astype(bf16), pois.astype(bf16), cdims,
                            preferred_element_type=f32)
    c_all = jnp.sum(q_all * u_all, axis=1, keepdims=True)
    scores = s_all - t_all * c_all                           # (2B+P, n_loc)

    nb = q1.shape[0]
    score_ref[...] = scores[:nb]
    score3_ref[...] = scores[nb:2 * nb]
    score4_ref[...] = scores[2 * nb:]

    # ---- similarity score (normalize + complex product + matmul) ----
    u1 = u1_ref[...]
    norm = jnp.sqrt(jnp.sum(u1 * u1, axis=1, keepdims=True))
    u1n = u1 / jnp.maximum(norm, 1e-12)
    ab = cmul(u1n, sim_ref[...])                             # (S, 2R)
    sim_score_ref[...] = lax.dot_general(ab.astype(bf16), rs_ref[...].astype(bf16),
                                         cdims, preferred_element_type=f32)


def mcomplex21_fused(user, origin, tran, loc, inv, acc, delta, tim1, tim,
                     user2, p2o, p2t_row, u1, sim_e, pois, rs,
                     wa, wd, wi, w2b, wob, b1c, b2c, boc,
                     *, rank, test_transition):
    """Single-launch forward; everything (<1 MiB) resident in VMEM."""
    B = user.shape[0]
    P = user2.shape[0]
    S = u1.shape[0]
    n_loc = pois.shape[0]
    n_user = rs.shape[0]
    f32 = jnp.float32
    out_shape = (
        jax.ShapeDtypeStruct((B, n_loc), f32),          # score
        jax.ShapeDtypeStruct((B, n_loc), f32),          # score3
        jax.ShapeDtypeStruct((P, n_loc), f32),          # score4
        jax.ShapeDtypeStruct((S, n_user), f32),         # sim_score
    ) + tuple(jax.ShapeDtypeStruct((B, rank), f32) for _ in range(8)) + (
        jax.ShapeDtypeStruct((1, 1), f32),              # eng1
        jax.ShapeDtypeStruct((1, 1), f32),              # eng2
    )
    return pl.pallas_call(
        functools.partial(_mega_kernel, rank=rank, test_transition=test_transition),
        out_shape=out_shape,
    )(user, origin, tran, loc, inv, acc, delta, tim1, tim,
      user2, p2o, p2t_row, u1, sim_e, pois, rs,
      wa, wd, wi, w2b, wob, b1c, b2c, boc)


# ------------------------------ parameter init ------------------------------

def init_params(key, sizes, rank, init_size=1e-3):
    # embedding tables, same order as the PyTorch ModuleList
    table_sizes = [sizes[2], sizes[6], sizes[2], sizes[5], sizes[3], sizes[4],
                   sizes[4], sizes[4], sizes[1], sizes[1], sizes[0], sizes[7]]
    keys = jax.random.split(key, len(table_sizes) + 6)
    emb = [init_size * jax.random.normal(keys[i], (n, 2 * rank), jnp.float32)
           for i, n in enumerate(table_sizes)]
    k = len(table_sizes)

    def linear(kw, kb, fan_in, fan_out):
        bound = 1.0 / float(np.sqrt(fan_in))
        w = jax.random.uniform(kw, (fan_in, fan_out), jnp.float32, -bound, bound)
        b = jax.random.uniform(kb, (1, fan_out), jnp.float32, -bound, bound)
        return w, b

    # MComplEx21: hidden1: 3*rank -> 200, hidden2: 2*rank -> 200, out: 200 -> rank
    w_h1, b_h1 = linear(keys[k + 0], keys[k + 1], 3 * rank, HID)
    w_h2, b_h2 = linear(keys[k + 2], keys[k + 3], 2 * rank, HID)
    w_out, b_out = linear(keys[k + 4], keys[k + 5], HID, rank)
    return dict(emb=emb, w_h1=w_h1, b_h1=b_h1, w_h2=w_h2, b_h2=b_h2,
                w_out=w_out, b_out=b_out)


def _pack_mlp_weights(params, rank):
    """Pad hidden 200->256 and build block-diagonal [W|0;0|W] weights so the
    real & imag MLP halves are computed together with lane-aligned matmuls."""
    R = rank
    w1, b1 = params['w_h1'], params['b_h1']
    w2, b2 = params['w_h2'], params['b_h2']
    wo, bo = params['w_out'], params['b_out']
    H = w1.shape[1]
    pad_h = ((0, 0), (0, HID_PAD - H))
    w1p = jnp.pad(w1, pad_h)                      # (3R, 256)
    w2p = jnp.pad(w2, pad_h)                      # (2R, 256)
    b1p = jnp.pad(b1, pad_h)                      # (1, 256)
    b2p = jnp.pad(b2, pad_h)
    wop = jnp.pad(wo, ((0, HID_PAD - H), (0, 0)))  # (256, R)

    def blockdiag(blk):
        z = jnp.zeros_like(blk)
        top = jnp.concatenate([blk, z], axis=1)
        bot = jnp.concatenate([z, blk], axis=1)
        return jnp.concatenate([top, bot], axis=0)

    wa = blockdiag(w1p[0:R])                      # acc block    (2R, 512)
    wd = blockdiag(w1p[R:2 * R])                  # delta block  (2R, 512)
    wi = blockdiag(w1p[2 * R:3 * R])              # inv block    (2R, 512)
    # path2 input is [p2t, p2t] -> weight rows sum
    w2b = blockdiag(w2p[0:R] + w2p[R:2 * R])      # (2R, 512)
    wob = blockdiag(wop)                          # (512, 2R)
    b1c = jnp.concatenate([b1p, b1p], axis=1)     # (1, 512)
    b2c = jnp.concatenate([b2p, b2p], axis=1)     # (1, 512)
    boc = jnp.concatenate([bo, bo], axis=1)       # (1, 2R)
    return wa, wd, wi, w2b, wob, b1c, b2c, boc


# ---------------------------------- forward ----------------------------------

def forward(params, x, path2_origin, path2_mid, path2_user, similar,
            *, rank, test_transition=True):
    emb = params['emb']
    R = rank

    # ---- embedding gathers + diachronic (tiny XLA glue) ----
    user = emb[10][x[:, 0]]
    origin = emb[0][x[:, 6]]
    tran = emb[1][x[:, 8]]
    loc = emb[2][x[:, 3]]
    inv = emb[3][x[:, 5]]
    acc = emb[4][x[:, 2]]
    t = x[:, 7].astype(jnp.float32).reshape(-1, 1)
    delta = emb[5][x[:, 7]] * jnp.sin(emb[6][x[:, 7]] * t + emb[7][x[:, 7]])
    tim1 = emb[8][x[:, 4]]
    tim = emb[9][x[:, 1]]

    user2 = emb[10][path2_user]
    p2o = emb[0][path2_origin]
    p2t_row = emb[1][x[0:1, 8]]          # (1, 2R); broadcast against user2 in-kernel
    # TODO(synk): the reference also embeds+projects `path2_mid`, but that value
    #             never contributes to any returned output, so it is skipped.
    del path2_mid

    u1 = emb[10][similar[:, 0]]
    sim_e = emb[11][similar[:, 1]]

    packed_w = _pack_mlp_weights(params, R)

    outs = mcomplex21_fused(
        user, origin, tran, loc, inv, acc, delta, tim1, tim,
        user2, p2o, p2t_row, u1, sim_e, emb[2], emb[10], *packed_w,
        rank=R, test_transition=test_transition)

    (score, score3, score4, sim_score,
     reg_origin, reg_tran, reg_acc, reg_inv, reg_loc, reg_delta,
     reg_tim1, reg_tim, eng1, eng2) = outs

    regs = (reg_origin, reg_tran, reg_acc, reg_inv, reg_loc, reg_delta,
            reg_tim1, reg_tim)
    return score, sim_score, score3, score4, regs, eng1[0, 0], eng2[0, 0]


# ---------------------- pure numpy (float64) reference -----------------------

def ref_forward_np(params, x, p2o_idx, p2u_idx, similar, rank, test_transition=True):
    E = [np.asarray(e, np.float64) for e in params['emb']]
    w_h1 = np.asarray(params['w_h1'], np.float64)
    b_h1 = np.asarray(params['b_h1'], np.float64)
    w_h2 = np.asarray(params['w_h2'], np.float64)
    b_h2 = np.asarray(params['b_h2'], np.float64)
    w_out = np.asarray(params['w_out'], np.float64)
    b_out = np.asarray(params['b_out'], np.float64)
    x = np.asarray(x); similar = np.asarray(similar)
    p2o_idx = np.asarray(p2o_idx); p2u_idx = np.asarray(p2u_idx)

    def proj(e, u):
        return e - u * np.sum(u * e, axis=1, keepdims=True)

    def split(a):
        return a[:, :rank], a[:, rank:]

    def mlp_np(z, w1, b1):
        return np.maximum(z @ w1 + b1, 0.0) @ w_out + b_out

    user = E[10][x[:, 0]]
    origin = proj(E[0][x[:, 6]], user)
    tran = proj(E[1][x[:, 8]], user)
    loc = proj(E[2][x[:, 3]], user)
    inv = proj(E[3][x[:, 5]], user)
    acc = proj(E[4][x[:, 2]], user)
    t = x[:, 7].astype(np.float64).reshape(-1, 1)
    delta = proj(E[5][x[:, 7]] * np.sin(E[6][x[:, 7]] * t + E[7][x[:, 7]]), user)
    tim1 = proj(E[8][x[:, 4]], user)
    tim = proj(E[9][x[:, 1]], user)

    o, tr, lo, iv, ac, de, t1, tm = map(
        split, (origin, tran, loc, inv, acc, delta, tim1, tim))
    rel1_0 = mlp_np(np.concatenate([ac[0], de[0], iv[0]], 1), w_h1, b_h1)
    rel1_1 = mlp_np(np.concatenate([ac[1], de[1], iv[1]], 1), w_h1, b_h1)

    user2 = E[10][p2u_idx]
    p2o = proj(E[0][p2o_idx], user2)
    p2t = proj(E[1][np.full(len(p2o_idx), x[0, 8])], user2)
    po, pt = split(p2o), split(p2t)
    rel2_0 = mlp_np(np.concatenate([pt[0], pt[0]], 1), w_h2, b_h2)
    rel2_1 = mlp_np(np.concatenate([pt[1], pt[1]], 1), w_h2, b_h2)

    pois = E[2]

    def pscore(q0, q1, u):
        q = np.concatenate([q0, q1], 1)
        return q @ pois.T - (u @ pois.T) * np.sum(q * u, axis=1, keepdims=True)

    if test_transition:
        score = pscore(o[0] * tr[0] - o[1] * tr[1], o[0] * tr[1] + o[1] * tr[0], user)
    else:
        score = pscore(tm[0] * iv[0] - tm[1] * iv[1], tm[0] * iv[1] + tm[1] * iv[0], user)
    score3 = pscore(o[0] * rel1_0 - o[1] * rel1_1, o[0] * rel1_1 + o[1] * rel1_0, user)
    score4 = pscore(po[0] * rel2_0 - po[1] * rel2_1,
                    po[0] * rel2_1 + po[1] * rel2_0, user2)

    u1 = E[10][similar[:, 0]]
    u1 = u1 / np.maximum(np.linalg.norm(u1, axis=1, keepdims=True), 1e-12)
    se = E[11][similar[:, 1]]
    a = u1[:, :rank] * se[:, :rank] - u1[:, rank:] * se[:, rank:]
    b = u1[:, rank:] * se[:, :rank] + u1[:, :rank] * se[:, rank:]
    rs = E[10]
    sim_score = a @ rs[:, :rank].T + b @ rs[:, rank:].T

    def regf(c):
        return np.sqrt(c[0] ** 2 + c[1] ** 2)

    regs = (regf(o), regf(tr), regf(ac), regf(iv), regf(lo), regf(de),
            regf(t1), regf(tm))
    eng1 = np.sum(np.sqrt((rel1_0 - tr[0]) ** 2 + (rel1_1 - tr[1]) ** 2)) / 2.0
    eng2 = np.sum(np.sqrt((rel2_0 - pt[0]) ** 2 + (rel2_1 - pt[1]) ** 2)) / 2.0
    return score, sim_score, score3, score4, regs, eng1, eng2


# ------------------------------------ main ------------------------------------

if __name__ == "__main__":
    # sizes = (n_user, n_tim, n_loc, n_acc, n_delta, n_inv, n_tran, n_sim)
    sizes = (16, 10, 256, 12, 14, 9, 7, 11)
    rank = 32
    B, P, S = 8, 8, 8

    key = jax.random.PRNGKey(0)
    kp, kx, k2, ks = jax.random.split(key, 4)
    # init_size=0.1 just for better-conditioned numerics in the self-test
    params = init_params(kp, sizes, rank, init_size=0.1)

    maxes = [sizes[0], sizes[1], sizes[3], sizes[2], sizes[1],
             sizes[5], sizes[2], sizes[4], sizes[6]]
    xk = jax.random.split(kx, 9)
    x = jnp.stack([jax.random.randint(xk[i], (B,), 0, maxes[i], dtype=jnp.int32)
                   for i in range(9)], axis=1)

    k2a, k2b, k2c = jax.random.split(k2, 3)
    path2_origin = jax.random.randint(k2a, (P,), 0, sizes[2], dtype=jnp.int32)
    path2_mid = jax.random.randint(k2b, (P,), 0, sizes[2], dtype=jnp.int32)
    path2_user = jax.random.randint(k2c, (P,), 0, sizes[0], dtype=jnp.int32)

    ks0, ks1 = jax.random.split(ks, 2)
    similar = jnp.stack(
        [jax.random.randint(ks0, (S,), 0, sizes[0], dtype=jnp.int32),
         jax.random.randint(ks1, (S,), 0, sizes[7], dtype=jnp.int32)], axis=1)

    fwd = jax.jit(functools.partial(forward, rank=rank, test_transition=True))
    outs = jax.block_until_ready(
        fwd(params, x, path2_origin, path2_mid, path2_user, similar))

    score, sim_score, score3, score4, regs, e1, e2 = outs
    assert score.shape == (B, sizes[2])
    assert sim_score.shape == (S, sizes[0])
    assert score3.shape == (B, sizes[2])
    assert score4.shape == (P, sizes[2])
    assert all(r.shape == (B, rank) for r in regs)
    assert e1.shape == () and e2.shape == ()

    # numerical check against a float64 numpy reference of the PyTorch forward
    (ref_score, ref_sim, ref_s3, ref_s4,
     ref_regs, ref_e1, ref_e2) = ref_forward_np(
        params, x, path2_origin, path2_user, similar, rank, test_transition=True)

    def rel_err(got, ref):
        got = np.asarray(got, np.float64)
        ref = np.asarray(ref, np.float64)
        return float(np.max(np.abs(got - ref)) / (np.max(np.abs(ref)) + 1e-30))

    assert rel_err(score, ref_score) < 2e-2, rel_err(score, ref_score)
    assert rel_err(sim_score, ref_sim) < 2e-2, rel_err(sim_score, ref_sim)
    assert rel_err(score3, ref_s3) < 2e-2, rel_err(score3, ref_s3)
    assert rel_err(score4, ref_s4) < 2e-2, rel_err(score4, ref_s4)
    for got_r, ref_r in zip(regs, ref_regs):
        assert rel_err(got_r, ref_r) < 2e-2, rel_err(got_r, ref_r)
    assert rel_err(e1, ref_e1) < 2e-2, rel_err(e1, ref_e1)
    assert rel_err(e2, ref_e2) < 2e-2, rel_err(e2, ref_e2)

    print("KERNEL_OK")
</pallas_src>

<mosaic_0001>
module attributes {stable_mosaic.version = 11 : i64} {
  func.func @_mega_kernel(%arg0: memref<8x64xf32, #tpu.memory_space<vmem>>, %arg1: memref<8x64xf32, #tpu.memory_space<vmem>>, %arg2: memref<8x64xf32, #tpu.memory_space<vmem>>, %arg3: memref<8x64xf32, #tpu.memory_space<vmem>>, %arg4: memref<8x64xf32, #tpu.memory_space<vmem>>, %arg5: memref<8x64xf32, #tpu.memory_space<vmem>>, %arg6: memref<8x64xf32, #tpu.memory_space<vmem>>, %arg7: memref<8x64xf32, #tpu.memory_space<vmem>>, %arg8: memref<8x64xf32, #tpu.memory_space<vmem>>, %arg9: memref<8x64xf32, #tpu.memory_space<vmem>>, %arg10: memref<8x64xf32, #tpu.memory_space<vmem>>, %arg11: memref<1x64xf32, #tpu.memory_space<vmem>>, %arg12: memref<8x64xf32, #tpu.memory_space<vmem>>, %arg13: memref<8x64xf32, #tpu.memory_space<vmem>>, %arg14: memref<256x64xf32, #tpu.memory_space<vmem>>, %arg15: memref<16x64xf32, #tpu.memory_space<vmem>>, %arg16: memref<64x512xf32, #tpu.memory_space<vmem>>, %arg17: memref<64x512xf32, #tpu.memory_space<vmem>>, %arg18: memref<64x512xf32, #tpu.memory_space<vmem>>, %arg19: memref<64x512xf32, #tpu.memory_space<vmem>>, %arg20: memref<512x64xf32, #tpu.memory_space<vmem>>, %arg21: memref<1x512xf32, #tpu.memory_space<vmem>>, %arg22: memref<1x512xf32, #tpu.memory_space<vmem>>, %arg23: memref<1x64xf32, #tpu.memory_space<vmem>>, %arg24: memref<8x256xf32, #tpu.memory_space<vmem>>, %arg25: memref<8x256xf32, #tpu.memory_space<vmem>>, %arg26: memref<8x256xf32, #tpu.memory_space<vmem>>, %arg27: memref<8x16xf32, #tpu.memory_space<vmem>>, %arg28: memref<8x32xf32, #tpu.memory_space<vmem>>, %arg29: memref<8x32xf32, #tpu.memory_space<vmem>>, %arg30: memref<8x32xf32, #tpu.memory_space<vmem>>, %arg31: memref<8x32xf32, #tpu.memory_space<vmem>>, %arg32: memref<8x32xf32, #tpu.memory_space<vmem>>, %arg33: memref<8x32xf32, #tpu.memory_space<vmem>>, %arg34: memref<8x32xf32, #tpu.memory_space<vmem>>, %arg35: memref<8x32xf32, #tpu.memory_space<vmem>>, %arg36: memref<1x1xf32, #tpu.memory_space<vmem>>, %arg37: memref<1x1xf32, #tpu.memory_space<vmem>>) attributes {dimension_semantics = [], scalar_prefetch = 0 : i64, scratch_operands = 0 : i64, tpu.core_type = #tpu.core_type<tc>} {
    %c0 = arith.constant 0 : index
    %c0_0 = arith.constant 0 : index
    %0 = vector.load %arg0[%c0, %c0_0] : memref<8x64xf32, #tpu.memory_space<vmem>>, vector<8x64xf32>
    %c0_1 = arith.constant 0 : index
    %c0_2 = arith.constant 0 : index
    %1 = vector.load %arg1[%c0_1, %c0_2] : memref<8x64xf32, #tpu.memory_space<vmem>>, vector<8x64xf32>
    %2 = arith.mulf %0, %1 : vector<8x64xf32>
    %cst = arith.constant dense<0.000000e+00> : vector<8xf32>
    %3 = vector.multi_reduction <add>, %2, %cst [1] : vector<8x64xf32> to vector<8xf32>
    %4 = vector.shape_cast %3 : vector<8xf32> to vector<8x1xf32>
    %5 = vector.broadcast %4 : vector<8x1xf32> to vector<8x64xf32>
    %6 = arith.mulf %0, %5 : vector<8x64xf32>
    %7 = arith.subf %1, %6 : vector<8x64xf32>
    %c0_3 = arith.constant 0 : index
    %c0_4 = arith.constant 0 : index
    %8 = vector.load %arg2[%c0_3, %c0_4] : memref<8x64xf32, #tpu.memory_space<vmem>>, vector<8x64xf32>
    %9 = arith.mulf %0, %8 : vector<8x64xf32>
    %cst_5 = arith.constant dense<0.000000e+00> : vector<8xf32>
    %10 = vector.multi_reduction <add>, %9, %cst_5 [1] : vector<8x64xf32> to vector<8xf32>
    %11 = vector.shape_cast %10 : vector<8xf32> to vector<8x1xf32>
    %12 = vector.broadcast %11 : vector<8x1xf32> to vector<8x64xf32>
    %13 = arith.mulf %0, %12 : vector<8x64xf32>
    %14 = arith.subf %8, %13 : vector<8x64xf32>
    %c0_6 = arith.constant 0 : index
    %c0_7 = arith.constant 0 : index
    %15 = vector.load %arg3[%c0_6, %c0_7] : memref<8x64xf32, #tpu.memory_space<vmem>>, vector<8x64xf32>
    %16 = arith.mulf %0, %15 : vector<8x64xf32>
    %cst_8 = arith.constant dense<0.000000e+00> : vector<8xf32>
    %17 = vector.multi_reduction <add>, %16, %cst_8 [1] : vector<8x64xf32> to vector<8xf32>
    %18 = vector.shape_cast %17 : vector<8xf32> to vector<8x1xf32>
    %19 = vector.broadcast %18 : vector<8x1xf32> to vector<8x64xf32>
    %20 = arith.mulf %0, %19 : vector<8x64xf32>
    %21 = arith.subf %15, %20 : vector<8x64xf32>
    %c0_9 = arith.constant 0 : index
    %c0_10 = arith.constant 0 : index
    %22 = vector.load %arg4[%c0_9, %c0_10] : memref<8x64xf32, #tpu.memory_space<vmem>>, vector<8x64xf32>
    %23 = arith.mulf %0, %22 : vector<8x64xf32>
    %cst_11 = arith.constant dense<0.000000e+00> : vector<8xf32>
    %24 = vector.multi_reduction <add>, %23, %cst_11 [1] : vector<8x64xf32> to vector<8xf32>
    %25 = vector.shape_cast %24 : vector<8xf32> to vector<8x1xf32>
    %26 = vector.broadcast %25 : vector<8x1xf32> to vector<8x64xf32>
    %27 = arith.mulf %0, %26 : vector<8x64xf32>
    %28 = arith.subf %22, %27 : vector<8x64xf32>
    %c0_12 = arith.constant 0 : index
    %c0_13 = arith.constant 0 : index
    %29 = vector.load %arg5[%c0_12, %c0_13] : memref<8x64xf32, #tpu.memory_space<vmem>>, vector<8x64xf32>
    %30 = arith.mulf %0, %29 : vector<8x64xf32>
    %cst_14 = arith.constant dense<0.000000e+00> : vector<8xf32>
    %31 = vector.multi_reduction <add>, %30, %cst_14 [1] : vector<8x64xf32> to vector<8xf32>
    %32 = vector.shape_cast %31 : vector<8xf32> to vector<8x1xf32>
    %33 = vector.broadcast %32 : vector<8x1xf32> to vector<8x64xf32>
    %34 = arith.mulf %0, %33 : vector<8x64xf32>
    %35 = arith.subf %29, %34 : vector<8x64xf32>
    %c0_15 = arith.constant 0 : index
    %c0_16 = arith.constant 0 : index
    %36 = vector.load %arg6[%c0_15, %c0_16] : memref<8x64xf32, #tpu.memory_space<vmem>>, vector<8x64xf32>
    %37 = arith.mulf %0, %36 : vector<8x64xf32>
    %cst_17 = arith.constant dense<0.000000e+00> : vector<8xf32>
    %38 = vector.multi_reduction <add>, %37, %cst_17 [1] : vector<8x64xf32> to vector<8xf32>
    %39 = vector.shape_cast %38 : vector<8xf32> to vector<8x1xf32>
    %40 = vector.broadcast %39 : vector<8x1xf32> to vector<8x64xf32>
    %41 = arith.mulf %0, %40 : vector<8x64xf32>
    %42 = arith.subf %36, %41 : vector<8x64xf32>
    %c0_18 = arith.constant 0 : index
    %c0_19 = arith.constant 0 : index
    %43 = vector.load %arg7[%c0_18, %c0_19] : memref<8x64xf32, #tpu.memory_space<vmem>>, vector<8x64xf32>
    %44 = arith.mulf %0, %43 : vector<8x64xf32>
    %cst_20 = arith.constant dense<0.000000e+00> : vector<8xf32>
    %45 = vector.multi_reduction <add>, %44, %cst_20 [1] : vector<8x64xf32> to vector<8xf32>
    %46 = vector.shape_cast %45 : vector<8xf32> to vector<8x1xf32>
    %47 = vector.broadcast %46 : vector<8x1xf32> to vector<8x64xf32>
    %48 = arith.mulf %0, %47 : vector<8x64xf32>
    %49 = arith.subf %43, %48 : vector<8x64xf32>
    %c0_21 = arith.constant 0 : index
    %c0_22 = arith.constant 0 : index
    %50 = vector.load %arg8[%c0_21, %c0_22] : memref<8x64xf32, #tpu.memory_space<vmem>>, vector<8x64xf32>
    %51 = arith.mulf %0, %50 : vector<8x64xf32>
    %cst_23 = arith.constant dense<0.000000e+00> : vector<8xf32>
    %52 = vector.multi_reduction <add>, %51, %cst_23 [1] : vector<8x64xf32> to vector<8xf32>
    %53 = vector.shape_cast %52 : vector<8xf32> to vector<8x1xf32>
    %54 = vector.broadcast %53 : vector<8x1xf32> to vector<8x64xf32>
    %55 = arith.mulf %0, %54 : vector<8x64xf32>
    %56 = arith.subf %50, %55 : vector<8x64xf32>
    %c0_24 = arith.constant 0 : index
    %c0_25 = arith.constant 0 : index
    %57 = vector.load %arg9[%c0_24, %c0_25] : memref<8x64xf32, #tpu.memory_space<vmem>>, vector<8x64xf32>
    %c0_26 = arith.constant 0 : index
    %c0_27 = arith.constant 0 : index
    %58 = vector.load %arg10[%c0_26, %c0_27] : memref<8x64xf32, #tpu.memory_space<vmem>>, vector<8x64xf32>
    %59 = arith.mulf %57, %58 : vector<8x64xf32>
    %cst_28 = arith.constant dense<0.000000e+00> : vector<8xf32>
    %60 = vector.multi_reduction <add>, %59, %cst_28 [1] : vector<8x64xf32> to vector<8xf32>
    %61 = vector.shape_cast %60 : vector<8xf32> to vector<8x1xf32>
    %62 = vector.broadcast %61 : vector<8x1xf32> to vector<8x64xf32>
    %63 = arith.mulf %57, %62 : vector<8x64xf32>
    %64 = arith.subf %58, %63 : vector<8x64xf32>
    %c0_29 = arith.constant 0 : index
    %c0_30 = arith.constant 0 : index
    %65 = vector.load %arg11[%c0_29, %c0_30] : memref<1x64xf32, #tpu.memory_space<vmem>>, vector<1x64xf32>
    %66 = vector.broadcast %65 : vector<1x64xf32> to vector<8x64xf32>
    %67 = arith.mulf %57, %66 : vector<8x64xf32>
    %cst_31 = arith.constant dense<0.000000e+00> : vector<8xf32>
    %68 = vector.multi_reduction <add>, %67, %cst_31 [1] : vector<8x64xf32> to vector<8xf32>
    %69 = vector.shape_cast %68 : vector<8xf32> to vector<8x1xf32>
    %70 = vector.broadcast %69 : vector<8x1xf32> to vector<8x64xf32>
    %71 = arith.mulf %57, %70 : vector<8x64xf32>
    %72 = vector.broadcast %65 : vector<1x64xf32> to vector<8x64xf32>
    %73 = arith.subf %72, %71 : vector<8x64xf32>
    %74 = vector.extract_strided_slice %7 {offsets = [0, 0], sizes = [8, 32], strides = [1, 1]} : vector<8x64xf32> to vector<8x32xf32>
    %75 = arith.mulf %74, %74 : vector<8x32xf32>
    %76 = vector.extract_strided_slice %7 {offsets = [0, 32], sizes = [8, 32], strides = [1, 1]} : vector<8x64xf32> to vector<8x32xf32>
    %77 = arith.mulf %76, %76 : vector<8x32xf32>
    %78 = arith.addf %75, %77 : vector<8x32xf32>
    %79 = math.sqrt %78 : vector<8x32xf32>
    %c0_32 = arith.constant 0 : index
    %c0_33 = arith.constant 0 : index
    %80 = vector.load %arg28[%c0_32, %c0_33] : memref<8x32xf32, #tpu.memory_space<vmem>>, vector<8x32xf32>
    tpu.vector_store %arg28[%c0_32, %c0_33], %79 {strides = array<i32>} : memref<8x32xf32, #tpu.memory_space<vmem>>, vector<8x32xf32>,
    %81 = vector.extract_strided_slice %14 {offsets = [0, 0], sizes = [8, 32], strides = [1, 1]} : vector<8x64xf32> to vector<8x32xf32>
    %82 = arith.mulf %81, %81 : vector<8x32xf32>
    %83 = vector.extract_strided_slice %14 {offsets = [0, 32], sizes = [8, 32], strides = [1, 1]} : vector<8x64xf32> to vector<8x32xf32>
    %84 = arith.mulf %83, %83 : vector<8x32xf32>
    %85 = arith.addf %82, %84 : vector<8x32xf32>
    %86 = math.sqrt %85 : vector<8x32xf32>
    %c0_34 = arith.constant 0 : index
    %c0_35 = arith.constant 0 : index
    %87 = vector.load %arg29[%c0_34, %c0_35] : memref<8x32xf32, #tpu.memory_space<vmem>>, vector<8x32xf32>
    tpu.vector_store %arg29[%c0_34, %c0_35], %86 {strides = array<i32>} : memref<8x32xf32, #tpu.memory_space<vmem>>, vector<8x32xf32>,
    %88 = vector.extract_strided_slice %35 {offsets = [0, 0], sizes = [8, 32], strides = [1, 1]} : vector<8x64xf32> to vector<8x32xf32>
    %89 = arith.mulf %88, %88 : vector<8x32xf32>
    %90 = vector.extract_strided_slice %35 {offsets = [0, 32], sizes = [8, 32], strides = [1, 1]} : vector<8x64xf32> to vector<8x32xf32>
    %91 = arith.mulf %90, %90 : vector<8x32xf32>
    %92 = arith.addf %89, %91 : vector<8x32xf32>
    %93 = math.sqrt %92 : vector<8x32xf32>
    %c0_36 = arith.constant 0 : index
    %c0_37 = arith.constant 0 : index
    %94 = vector.load %arg30[%c0_36, %c0_37] : memref<8x32xf32, #tpu.memory_space<vmem>>, vector<8x32xf32>
    tpu.vector_store %arg30[%c0_36, %c0_37], %93 {strides = array<i32>} : memref<8x32xf32, #tpu.memory_space<vmem>>, vector<8x32xf32>,
    %95 = vector.extract_strided_slice %28 {offsets = [0, 0], sizes = [8, 32], strides = [1, 1]} : vector<8x64xf32> to vector<8x32xf32>
    %96 = arith.mulf %95, %95 : vector<8x32xf32>
    %97 = vector.extract_strided_slice %28 {offsets = [0, 32], sizes = [8, 32], strides = [1, 1]} : vector<8x64xf32> to vector<8x32xf32>
    %98 = arith.mulf %97, %97 : vector<8x32xf32>
    %99 = arith.addf %96, %98 : vector<8x32xf32>
    %100 = math.sqrt %99 : vector<8x32xf32>
    %c0_38 = arith.constant 0 : index
    %c0_39 = arith.constant 0 : index
    %101 = vector.load %arg31[%c0_38, %c0_39] : memref<8x32xf32, #tpu.memory_space<vmem>>, vector<8x32xf32>
    tpu.vector_store %arg31[%c0_38, %c0_39], %100 {strides = array<i32>} : memref<8x32xf32, #tpu.memory_space<vmem>>, vector<8x32xf32>,
    %102 = vector.extract_strided_slice %21 {offsets = [0, 0], sizes = [8, 32], strides = [1, 1]} : vector<8x64xf32> to vector<8x32xf32>
    %103 = arith.mulf %102, %102 : vector<8x32xf32>
    %104 = vector.extract_strided_slice %21 {offsets = [0, 32], sizes = [8, 32], strides = [1, 1]} : vector<8x64xf32> to vector<8x32xf32>
    %105 = arith.mulf %104, %104 : vector<8x32xf32>
    %106 = arith.addf %103, %105 : vector<8x32xf32>
    %107 = math.sqrt %106 : vector<8x32xf32>
    %c0_40 = arith.constant 0 : index
    %c0_41 = arith.constant 0 : index
    %108 = vector.load %arg32[%c0_40, %c0_41] : memref<8x32xf32, #tpu.memory_space<vmem>>, vector<8x32xf32>
    tpu.vector_store %arg32[%c0_40, %c0_41], %107 {strides = array<i32>} : memref<8x32xf32, #tpu.memory_space<vmem>>, vector<8x32xf32>,
    %109 = vector.extract_strided_slice %42 {offsets = [0, 0], sizes = [8, 32], strides = [1, 1]} : vector<8x64xf32> to vector<8x32xf32>
    %110 = arith.mulf %109, %109 : vector<8x32xf32>
    %111 = vector.extract_strided_slice %42 {offsets = [0, 32], sizes = [8, 32], strides = [1, 1]} : vector<8x64xf32> to vector<8x32xf32>
    %112 = arith.mulf %111, %111 : vector<8x32xf32>
    %113 = arith.addf %110, %112 : vector<8x32xf32>
    %114 = math.sqrt %113 : vector<8x32xf32>
    %c0_42 = arith.constant 0 : index
    %c0_43 = arith.constant 0 : index
    %115 = vector.load %arg33[%c0_42, %c0_43] : memref<8x32xf32, #tpu.memory_space<vmem>>, vector<8x32xf32>
    tpu.vector_store %arg33[%c0_42, %c0_43], %114 {strides = array<i32>} : memref<8x32xf32, #tpu.memory_space<vmem>>, vector<8x32xf32>,
    %116 = vector.extract_strided_slice %49 {offsets = [0, 0], sizes = [8, 32], strides = [1, 1]} : vector<8x64xf32> to vector<8x32xf32>
    %117 = arith.mulf %116, %116 : vector<8x32xf32>
    %118 = vector.extract_strided_slice %49 {offsets = [0, 32], sizes = [8, 32], strides = [1, 1]} : vector<8x64xf32> to vector<8x32xf32>
    %119 = arith.mulf %118, %118 : vector<8x32xf32>
    %120 = arith.addf %117, %119 : vector<8x32xf32>
    %121 = math.sqrt %120 : vector<8x32xf32>
    %c0_44 = arith.constant 0 : index
    %c0_45 = arith.constant 0 : index
    %122 = vector.load %arg34[%c0_44, %c0_45] : memref<8x32xf32, #tpu.memory_space<vmem>>, vector<8x32xf32>
    tpu.vector_store %arg34[%c0_44, %c0_45], %121 {strides = array<i32>} : memref<8x32xf32, #tpu.memory_space<vmem>>, vector<8x32xf32>,
    %123 = vector.extract_strided_slice %56 {offsets = [0, 0], sizes = [8, 32], strides = [1, 1]} : vector<8x64xf32> to vector<8x32xf32>
    %124 = arith.mulf %123, %123 : vector<8x32xf32>
    %125 = vector.extract_strided_slice %56 {offsets = [0, 32], sizes = [8, 32], strides = [1, 1]} : vector<8x64xf32> to vector<8x32xf32>
    %126 = arith.mulf %125, %125 : vector<8x32xf32>
    %127 = arith.addf %124, %126 : vector<8x32xf32>
    %128 = math.sqrt %127 : vector<8x32xf32>
    %c0_46 = arith.constant 0 : index
    %c0_47 = arith.constant 0 : index
    %129 = vector.load %arg35[%c0_46, %c0_47] : memref<8x32xf32, #tpu.memory_space<vmem>>, vector<8x32xf32>
    tpu.vector_store %arg35[%c0_46, %c0_47], %128 {strides = array<i32>} : memref<8x32xf32, #tpu.memory_space<vmem>>, vector<8x32xf32>,
    %c0_48 = arith.constant 0 : index
    %c0_49 = arith.constant 0 : index
    %130 = vector.load %arg16[%c0_48, %c0_49] : memref<64x512xf32, #tpu.memory_space<vmem>>, vector<64x512xf32>
    %cst_50 = arith.constant dense<0.000000e+00> : vector<8x512xf32>
    %131 = tpu.matmul %35, %130, %cst_50 {dimension_numbers = #tpu.dot_dimension_numbers<[1], [0], [0], [1], [0, 0, 1, 1], [], []>} : vector<8x64xf32>, vector<64x512xf32>, vector<8x512xf32> -> vector<8x512xf32>
    %c0_51 = arith.constant 0 : index
    %c0_52 = arith.constant 0 : index
    %132 = vector.load %arg17[%c0_51, %c0_52] : memref<64x512xf32, #tpu.memory_space<vmem>>, vector<64x512xf32>
    %cst_53 = arith.constant dense<0.000000e+00> : vector<8x512xf32>
    %133 = tpu.matmul %42, %132, %cst_53 {dimension_numbers = #tpu.dot_dimension_numbers<[1], [0], [0], [1], [0, 0, 1, 1], [], []>} : vector<8x64xf32>, vector<64x512xf32>, vector<8x512xf32> -> vector<8x512xf32>
    %134 = arith.addf %131, %133 : vector<8x512xf32>
    %c0_54 = arith.constant 0 : index
    %c0_55 = arith.constant 0 : index
    %135 = vector.load %arg18[%c0_54, %c0_55] : memref<64x512xf32, #tpu.memory_space<vmem>>, vector<64x512xf32>
    %cst_56 = arith.constant dense<0.000000e+00> : vector<8x512xf32>
    %136 = tpu.matmul %28, %135, %cst_56 {dimension_numbers = #tpu.dot_dimension_numbers<[1], [0], [0], [1], [0, 0, 1, 1], [], []>} : vector<8x64xf32>, vector<64x512xf32>, vector<8x512xf32> -> vector<8x512xf32>
    %137 = arith.addf %134, %136 : vector<8x512xf32>
    %c0_57 = arith.constant 0 : index
    %c0_58 = arith.constant 0 : index
    %138 = vector.load %arg21[%c0_57, %c0_58] : memref<1x512xf32, #tpu.memory_space<vmem>>, vector<1x512xf32>
    %139 = vector.broadcast %138 : vector<1x512xf32> to vector<8x512xf32>
    %140 = arith.addf %137, %139 : vector<8x512xf32>
    %cst_59 = arith.constant 0.000000e+00 : f32
    %141 = vector.broadcast %cst_59 : f32 to vector<8x512xf32>
    %142 = arith.maximumf %140, %141 : vector<8x512xf32>
    %c0_60 = arith.constant 0 : index
    %c0_61 = arith.constant 0 : index
    %143 = vector.load %arg20[%c0_60, %c0_61] : memref<512x64xf32, #tpu.memory_space<vmem>>, vector<512x64xf32>
    %cst_62 = arith.constant dense<0.000000e+00> : vector<8x64xf32>
    %144 = tpu.matmul %142, %143, %cst_62 {dimension_numbers = #tpu.dot_dimension_numbers<[1], [0], [0], [1], [0, 0, 1, 1], [], []>} : vector<8x512xf32>, vector<512x64xf32>, vector<8x64xf32> -> vector<8x64xf32>
    %c0_63 = arith.constant 0 : index
    %c0_64 = arith.constant 0 : index
    %145 = vector.load %arg23[%c0_63, %c0_64] : memref<1x64xf32, #tpu.memory_space<vmem>>, vector<1x64xf32>
    %146 = vector.broadcast %145 : vector<1x64xf32> to vector<8x64xf32>
    %147 = arith.addf %144, %146 : vector<8x64xf32>
    %c0_65 = arith.constant 0 : index
    %c0_66 = arith.constant 0 : index
    %148 = vector.load %arg19[%c0_65, %c0_66] : memref<64x512xf32, #tpu.memory_space<vmem>>, vector<64x512xf32>
    %cst_67 = arith.constant dense<0.000000e+00> : vector<8x512xf32>
    %149 = tpu.matmul %73, %148, %cst_67 {dimension_numbers = #tpu.dot_dimension_numbers<[1], [0], [0], [1], [0, 0, 1, 1], [], []>} : vector<8x64xf32>, vector<64x512xf32>, vector<8x512xf32> -> vector<8x512xf32>
    %c0_68 = arith.constant 0 : index
    %c0_69 = arith.constant 0 : index
    %150 = vector.load %arg22[%c0_68, %c0_69] : memref<1x512xf32, #tpu.memory_space<vmem>>, vector<1x512xf32>
    %151 = vector.broadcast %150 : vector<1x512xf32> to vector<8x512xf32>
    %152 = arith.addf %149, %151 : vector<8x512xf32>
    %cst_70 = arith.constant 0.000000e+00 : f32
    %153 = vector.broadcast %cst_70 : f32 to vector<8x512xf32>
    %154 = arith.maximumf %152, %153 : vector<8x512xf32>
    %c0_71 = arith.constant 0 : index
    %c0_72 = arith.constant 0 : index
    %155 = vector.load %arg20[%c0_71, %c0_72] : memref<512x64xf32, #tpu.memory_space<vmem>>, vector<512x64xf32>
    %cst_73 = arith.constant dense<0.000000e+00> : vector<8x64xf32>
    %156 = tpu.matmul %154, %155, %cst_73 {dimension_numbers = #tpu.dot_dimension_numbers<[1], [0], [0], [1], [0, 0, 1, 1], [], []>} : vector<8x512xf32>, vector<512x64xf32>, vector<8x64xf32> -> vector<8x64xf32>
    %c0_74 = arith.constant 0 : index
    %c0_75 = arith.constant 0 : index
    %157 = vector.load %arg23[%c0_74, %c0_75] : memref<1x64xf32, #tpu.memory_space<vmem>>, vector<1x64xf32>
    %158 = vector.broadcast %157 : vector<1x64xf32> to vector<8x64xf32>
    %159 = arith.addf %156, %158 : vector<8x64xf32>
    %160 = arith.subf %147, %14 : vector<8x64xf32>
    %161 = vector.extract_strided_slice %160 {offsets = [0, 0], sizes = [8, 32], strides = [1, 1]} : vector<8x64xf32> to vector<8x32xf32>
    %162 = arith.mulf %161, %161 : vector<8x32xf32>
    %163 = vector.extract_strided_slice %160 {offsets = [0, 32], sizes = [8, 32], strides = [1, 1]} : vector<8x64xf32> to vector<8x32xf32>
    %164 = arith.mulf %163, %163 : vector<8x32xf32>
    %165 = arith.addf %162, %164 : vector<8x32xf32>
    %166 = math.sqrt %165 : vector<8x32xf32>
    %cst_76 = arith.constant dense<0.000000e+00> : vector<8xf32>
    %167 = vector.multi_reduction <add>, %166, %cst_76 [1] : vector<8x32xf32> to vector<8xf32>
    %168 = vector.shape_cast %167 : vector<8xf32> to vector<8x1xf32>
    %cst_77 = arith.constant dense<0.000000e+00> : vector<1xf32>
    %169 = vector.multi_reduction <add>, %168, %cst_77 [0] : vector<8x1xf32> to vector<1xf32>
    %170 = vector.shape_cast %169 : vector<1xf32> to vector<1x1xf32>
    %cst_78 = arith.constant 5.000000e-01 : f32
    %171 = vector.broadcast %cst_78 : f32 to vector<1x1xf32>
    %172 = arith.mulf %171, %170 : vector<1x1xf32>
    %c0_79 = arith.constant 0 : index
    %c0_80 = arith.constant 0 : index
    %173 = vector.load %arg36[%c0_79, %c0_80] : memref<1x1xf32, #tpu.memory_space<vmem>>, vector<1x1xf32>
    tpu.vector_store %arg36[%c0_79, %c0_80], %172 {strides = array<i32>} : memref<1x1xf32, #tpu.memory_space<vmem>>, vector<1x1xf32>,
    %174 = arith.subf %159, %73 : vector<8x64xf32>
    %175 = vector.extract_strided_slice %174 {offsets = [0, 0], sizes = [8, 32], strides = [1, 1]} : vector<8x64xf32> to vector<8x32xf32>
    %176 = arith.mulf %175, %175 : vector<8x32xf32>
    %177 = vector.extract_strided_slice %174 {offsets = [0, 32], sizes = [8, 32], strides = [1, 1]} : vector<8x64xf32> to vector<8x32xf32>
    %178 = arith.mulf %177, %177 : vector<8x32xf32>
    %179 = arith.addf %176, %178 : vector<8x32xf32>
    %180 = math.sqrt %179 : vector<8x32xf32>
    %cst_81 = arith.constant dense<0.000000e+00> : vector<8xf32>
    %181 = vector.multi_reduction <add>, %180, %cst_81 [1] : vector<8x32xf32> to vector<8xf32>
    %182 = vector.shape_cast %181 : vector<8xf32> to vector<8x1xf32>
    %cst_82 = arith.constant dense<0.000000e+00> : vector<1xf32>
    %183 = vector.multi_reduction <add>, %182, %cst_82 [0] : vector<8x1xf32> to vector<1xf32>
    %184 = vector.shape_cast %183 : vector<1xf32> to vector<1x1xf32>
    %cst_83 = arith.constant 5.000000e-01 : f32
    %185 = vector.broadcast %cst_83 : f32 to vector<1x1xf32>
    %186 = arith.mulf %185, %184 : vector<1x1xf32>
    %c0_84 = arith.constant 0 : index
    %c0_85 = arith.constant 0 : index
    %187 = vector.load %arg37[%c0_84, %c0_85] : memref<1x1xf32, #tpu.memory_space<vmem>>, vector<1x1xf32>
    tpu.vector_store %arg37[%c0_84, %c0_85], %186 {strides = array<i32>} : memref<1x1xf32, #tpu.memory_space<vmem>>, vector<1x1xf32>,
    %188 = vector.extract_strided_slice %7 {offsets = [0, 0], sizes = [8, 32], strides = [1, 1]} : vector<8x64xf32> to vector<8x32xf32>
    %189 = vector.extract_strided_slice %7 {offsets = [0, 32], sizes = [8, 32], strides = [1, 1]} : vector<8x64xf32> to vector<8x32xf32>
    %190 = vector.extract_strided_slice %14 {offsets = [0, 0], sizes = [8, 32], strides = [1, 1]} : vector<8x64xf32> to vector<8x32xf32>
    %191 = vector.extract_strided_slice %14 {offsets = [0, 32], sizes = [8, 32], strides = [1, 1]} : vector<8x64xf32> to vector<8x32xf32>
    %192 = arith.mulf %188, %190 : vector<8x32xf32>
    %193 = arith.mulf %189, %191 : vector<8x32xf32>
    %194 = arith.subf %192, %193 : vector<8x32xf32>
    %195 = arith.mulf %188, %191 : vector<8x32xf32>
    %196 = arith.mulf %189, %190 : vector<8x32xf32>
    %197 = arith.addf %195, %196 : vector<8x32xf32>
    %198 = tpu.concatenate %194, %197 in 1 : vector<8x32xf32>, vector<8x32xf32> -> vector<8x64xf32>
    %199 = vector.extract_strided_slice %7 {offsets = [0, 0], sizes = [8, 32], strides = [1, 1]} : vector<8x64xf32> to vector<8x32xf32>
    %200 = vector.extract_strided_slice %7 {offsets = [0, 32], sizes = [8, 32], strides = [1, 1]} : vector<8x64xf32> to vector<8x32xf32>
    %201 = vector.extract_strided_slice %147 {offsets = [0, 0], sizes = [8, 32], strides = [1, 1]} : vector<8x64xf32> to vector<8x32xf32>
    %202 = vector.extract_strided_slice %147 {offsets = [0, 32], sizes = [8, 32], strides = [1, 1]} : vector<8x64xf32> to vector<8x32xf32>
    %203 = arith.mulf %199, %201 : vector<8x32xf32>
    %204 = arith.mulf %200, %202 : vector<8x32xf32>
    %205 = arith.subf %203, %204 : vector<8x32xf32>
    %206 = arith.mulf %199, %202 : vector<8x32xf32>
    %207 = arith.mulf %200, %201 : vector<8x32xf32>
    %208 = arith.addf %206, %207 : vector<8x32xf32>
    %209 = tpu.concatenate %205, %208 in 1 : vector<8x32xf32>, vector<8x32xf32> -> vector<8x64xf32>
    %210 = vector.extract_strided_slice %64 {offsets = [0, 0], sizes = [8, 32], strides = [1, 1]} : vector<8x64xf32> to vector<8x32xf32>
    %211 = vector.extract_strided_slice %64 {offsets = [0, 32], sizes = [8, 32], strides = [1, 1]} : vector<8x64xf32> to vector<8x32xf32>
    %212 = vector.extract_strided_slice %159 {offsets = [0, 0], sizes = [8, 32], strides = [1, 1]} : vector<8x64xf32> to vector<8x32xf32>
    %213 = vector.extract_strided_slice %159 {offsets = [0, 32], sizes = [8, 32], strides = [1, 1]} : vector<8x64xf32> to vector<8x32xf32>
    %214 = arith.mulf %210, %212 : vector<8x32xf32>
    %215 = arith.mulf %211, %213 : vector<8x32xf32>
    %216 = arith.subf %214, %215 : vector<8x32xf32>
    %217 = arith.mulf %210, %213 : vector<8x32xf32>
    %218 = arith.mulf %211, %212 : vector<8x32xf32>
    %219 = arith.addf %217, %218 : vector<8x32xf32>
    %220 = tpu.concatenate %216, %219 in 1 : vector<8x32xf32>, vector<8x32xf32> -> vector<8x64xf32>
    %221 = tpu.concatenate %198, %209, %220 in 0 : vector<8x64xf32>, vector<8x64xf32>, vector<8x64xf32> -> vector<24x64xf32>
    %222 = tpu.concatenate %0, %0, %57 in 0 : vector<8x64xf32>, vector<8x64xf32>, vector<8x64xf32> -> vector<24x64xf32>
    %c0_86 = arith.constant 0 : index
    %c0_87 = arith.constant 0 : index
    %223 = vector.load %arg14[%c0_86, %c0_87] : memref<256x64xf32, #tpu.memory_space<vmem>>, vector<256x64xf32>
    %224 = arith.truncf %221 : vector<24x64xf32> to vector<24x64xbf16>
    %225 = arith.truncf %223 : vector<256x64xf32> to vector<256x64xbf16>
    %cst_88 = arith.constant dense<0.000000e+00> : vector<24x256xf32>
    %226 = tpu.matmul %224, %225, %cst_88 {dimension_numbers = #tpu.dot_dimension_numbers<[1], [1], [0], [0], [0, 0, 1, 0], [], []>} : vector<24x64xbf16>, vector<256x64xbf16>, vector<24x256xf32> -> vector<24x256xf32>
    %227 = arith.truncf %222 : vector<24x64xf32> to vector<24x64xbf16>
    %228 = arith.truncf %223 : vector<256x64xf32> to vector<256x64xbf16>
    %cst_89 = arith.constant dense<0.000000e+00> : vector<24x256xf32>
    %229 = tpu.matmul %227, %228, %cst_89 {dimension_numbers = #tpu.dot_dimension_numbers<[1], [1], [0], [0], [0, 0, 1, 0], [], []>} : vector<24x64xbf16>, vector<256x64xbf16>, vector<24x256xf32> -> vector<24x256xf32>
    %230 = arith.mulf %221, %222 : vector<24x64xf32>
    %cst_90 = arith.constant dense<0.000000e+00> : vector<24xf32>
    %231 = vector.multi_reduction <add>, %230, %cst_90 [1] : vector<24x64xf32> to vector<24xf32>
    %232 = vector.shape_cast %231 : vector<24xf32> to vector<24x1xf32>
    %233 = vector.broadcast %232 : vector<24x1xf32> to vector<24x256xf32>
    %234 = arith.mulf %229, %233 : vector<24x256xf32>
    %235 = arith.subf %226, %234 : vector<24x256xf32>
    %236 = vector.extract_strided_slice %235 {offsets = [0, 0], sizes = [8, 256], strides = [1, 1]} : vector<24x256xf32> to vector<8x256xf32>
    %c0_91 = arith.constant 0 : index
    %c0_92 = arith.constant 0 : index
    %237 = vector.load %arg24[%c0_91, %c0_92] : memref<8x256xf32, #tpu.memory_space<vmem>>, vector<8x256xf32>
    tpu.vector_store %arg24[%c0_91, %c0_92], %236 {strides = array<i32>} : memref<8x256xf32, #tpu.memory_space<vmem>>, vector<8x256xf32>,
    %238 = vector.extract_strided_slice %235 {offsets = [8, 0], sizes = [8, 256], strides = [1, 1]} : vector<24x256xf32> to vector<8x256xf32>
    %c0_93 = arith.constant 0 : index
    %c0_94 = arith.constant 0 : index
    %239 = vector.load %arg25[%c0_93, %c0_94] : memref<8x256xf32, #tpu.memory_space<vmem>>, vector<8x256xf32>
    tpu.vector_store %arg25[%c0_93, %c0_94], %238 {strides = array<i32>} : memref<8x256xf32, #tpu.memory_space<vmem>>, vector<8x256xf32>,
    %240 = vector.extract_strided_slice %235 {offsets = [16, 0], sizes = [8, 256], strides = [1, 1]} : vector<24x256xf32> to vector<8x256xf32>
    %c0_95 = arith.constant 0 : index
    %c0_96 = arith.constant 0 : index
    %241 = vector.load %arg26[%c0_95, %c0_96] : memref<8x256xf32, #tpu.memory_space<vmem>>, vector<8x256xf32>
    tpu.vector_store %arg26[%c0_95, %c0_96], %240 {strides = array<i32>} : memref<8x256xf32, #tpu.memory_space<vmem>>, vector<8x256xf32>,
    %c0_97 = arith.constant 0 : index
    %c0_98 = arith.constant 0 : index
    %242 = vector.load %arg12[%c0_97, %c0_98] : memref<8x64xf32, #tpu.memory_space<vmem>>, vector<8x64xf32>
    %243 = arith.mulf %242, %242 : vector<8x64xf32>
    %cst_99 = arith.constant dense<0.000000e+00> : vector<8xf32>
    %244 = vector.multi_reduction <add>, %243, %cst_99 [1] : vector<8x64xf32> to vector<8xf32>
    %245 = vector.shape_cast %244 : vector<8xf32> to vector<8x1xf32>
    %246 = math.sqrt %245 : vector<8x1xf32>
    %cst_100 = arith.constant 9.99999996E-13 : f32
    %247 = vector.broadcast %cst_100 : f32 to vector<8x1xf32>
    %248 = arith.maximumf %246, %247 : vector<8x1xf32>
    %249 = vector.broadcast %248 : vector<8x1xf32> to vector<8x64xf32>
    %250 = arith.divf %242, %249 : vector<8x64xf32>
    %c0_101 = arith.constant 0 : index
    %c0_102 = arith.constant 0 : index
    %251 = vector.load %arg13[%c0_101, %c0_102] : memref<8x64xf32, #tpu.memory_space<vmem>>, vector<8x64xf32>
    %252 = vector.extract_strided_slice %250 {offsets = [0, 0], sizes = [8, 32], strides = [1, 1]} : vector<8x64xf32> to vector<8x32xf32>
    %253 = vector.extract_strided_slice %250 {offsets = [0, 32], sizes = [8, 32], strides = [1, 1]} : vector<8x64xf32> to vector<8x32xf32>
    %254 = vector.extract_strided_slice %251 {offsets = [0, 0], sizes = [8, 32], strides = [1, 1]} : vector<8x64xf32> to vector<8x32xf32>
    %255 = vector.extract_strided_slice %251 {offsets = [0, 32], sizes = [8, 32], strides = [1, 1]} : vector<8x64xf32> to vector<8x32xf32>
    %256 = arith.mulf %252, %254 : vector<8x32xf32>
    %257 = arith.mulf %253, %255 : vector<8x32xf32>
    %258 = arith.subf %256, %257 : vector<8x32xf32>
    %259 = arith.mulf %252, %255 : vector<8x32xf32>
    %260 = arith.mulf %253, %254 : vector<8x32xf32>
    %261 = arith.addf %259, %260 : vector<8x32xf32>
    %262 = tpu.concatenate %258, %261 in 1 : vector<8x32xf32>, vector<8x32xf32> -> vector<8x64xf32>
    %263 = arith.truncf %262 : vector<8x64xf32> to vector<8x64xbf16>
    %c0_103 = arith.constant 0 : index
    %c0_104 = arith.constant 0 : index
    %264 = vector.load %arg15[%c0_103, %c0_104] : memref<16x64xf32, #tpu.memory_space<vmem>>, vector<16x64xf32>
    %265 = arith.truncf %264 : vector<16x64xf32> to vector<16x64xbf16>
    %cst_105 = arith.constant dense<0.000000e+00> : vector<8x16xf32>
    %266 = tpu.matmul %263, %265, %cst_105 {dimension_numbers = #tpu.dot_dimension_numbers<[1], [1], [0], [0], [0, 0, 1, 0], [], []>} : vector<8x64xbf16>, vector<16x64xbf16>, vector<8x16xf32> -> vector<8x16xf32>
    %c0_106 = arith.constant 0 : index
    %c0_107 = arith.constant 0 : index
    %267 = vector.load %arg27[%c0_106, %c0_107] : memref<8x16xf32, #tpu.memory_space<vmem>>, vector<8x16xf32>
    tpu.vector_store %arg27[%c0_106, %c0_107], %266 {strides = array<i32>} : memref<8x16xf32, #tpu.memory_space<vmem>>, vector<8x16xf32>,
    return
  }
}

</mosaic_0001>

<llo_original>
// kernel: forward.1
$region0: #{forward.1}
  #allocation0 [shape = 'u32[]', space=smem, size = 0x4, offset = 0x4, fixed_abs, tag = 'smem constant byte address 0x4 - core index']
  #allocation1 [shape = 'u32[144,128]{1,0:T(1,128)}', space=vmem, size = 0x12000, scoped, tag = 'internal scratch']
  %s0 = inlined_call_operand.smem [shape: u32[38], index: -1, kind: input, shape index: {}]
  %s1 = sld [smem:[%s0]]
  %s2 = scalar_lea.smem %s0, 1
  %s3 = sld [smem:[%s2]]
  %s4 = scalar_lea.smem %s0, 2
  %s5 = sld [smem:[%s4]]
  %s6 = scalar_lea.smem %s0, 3
  %s7 = sld [smem:[%s6]]
  %s8 = scalar_lea.smem %s0, 4
  %s9 = sld [smem:[%s8]]
  %s10 = scalar_lea.smem %s0, 5
  %s11 = sld [smem:[%s10]]
  %s12 = scalar_lea.smem %s0, 6
  %s13 = sld [smem:[%s12]]
  %s14 = scalar_lea.smem %s0, 7
  %s15 = sld [smem:[%s14]]
  %s16 = scalar_lea.smem %s0, 8
  %s17 = sld [smem:[%s16]]
  %s18 = scalar_lea.smem %s0, 9
  %s19 = sld [smem:[%s18]]
  %s20 = scalar_lea.smem %s0, 10
  %s21 = sld [smem:[%s20]]
  %s22 = scalar_lea.smem %s0, 11
  %s23 = sld [smem:[%s22]]
  %s24 = scalar_lea.smem %s0, 12
  %s25 = sld [smem:[%s24]]
  %s26 = scalar_lea.smem %s0, 13
  %s27 = sld [smem:[%s26]]
  %s28 = scalar_lea.smem %s0, 14
  %s29 = sld [smem:[%s28]]
  %s30 = scalar_lea.smem %s0, 15
  %s31 = sld [smem:[%s30]]
  %s32 = scalar_lea.smem %s0, 16
  %s33 = sld [smem:[%s32]]
  %s34 = scalar_lea.smem %s0, 17
  %s35 = sld [smem:[%s34]]
  %s36 = scalar_lea.smem %s0, 18
  %s37 = sld [smem:[%s36]]
  %s38 = scalar_lea.smem %s0, 19
  %s39 = sld [smem:[%s38]]
  %s40 = scalar_lea.smem %s0, 20
  %s41 = sld [smem:[%s40]]
  %s42 = scalar_lea.smem %s0, 21
  %s43 = sld [smem:[%s42]]
  %s44 = scalar_lea.smem %s0, 22
  %s45 = sld [smem:[%s44]]
  %s46 = scalar_lea.smem %s0, 23
  %s47 = sld [smem:[%s46]]
  %s48 = scalar_lea.smem %s0, 24
  %s49 = sld [smem:[%s48]]
  %s50 = scalar_lea.smem %s0, 25
  %s51 = sld [smem:[%s50]]
  %s52 = scalar_lea.smem %s0, 26
  %s53 = sld [smem:[%s52]]
  %s54 = scalar_lea.smem %s0, 27
  %s55 = sld [smem:[%s54]]
  %s56 = scalar_lea.smem %s0, 28
  %s57 = sld [smem:[%s56]]
  %s58 = scalar_lea.smem %s0, 29
  %s59 = sld [smem:[%s58]]
  %s60 = scalar_lea.smem %s0, 30
  %s61 = sld [smem:[%s60]]
  %s62 = scalar_lea.smem %s0, 31
  %s63 = sld [smem:[%s62]]
  %s64 = scalar_lea.smem %s0, 32
  %s65 = sld [smem:[%s64]]
  %s66 = scalar_lea.smem %s0, 33
  %s67 = sld [smem:[%s66]]
  %s68 = scalar_lea.smem %s0, 34
  %s69 = sld [smem:[%s68]]
  %s70 = scalar_lea.smem %s0, 35
  %s71 = sld [smem:[%s70]]
  %s72 = scalar_lea.smem %s0, 36
  %s73 = sld [smem:[%s72]]
  %s74 = scalar_lea.smem %s0, 37
  %s75 = sld [smem:[%s74]]
  %76 = xla_tuple %s49, %s51, %s53, %s55, %s57, %s59, %s61, %s63, %s65, %s67, %s69, %s71, %s73, %s75
  %s77 = sld [smem:[#allocation0]]
  $region210: #{forward.1} parent=0
    _
  %s79 = ssub.s32 1, %s77
  %s80 = scalar_select 0, %s79, %s77
  $region1: #{forward.1} parent=0
    #allocation2 [shape = 'u8[8192]{0}', space=vmem, size = 0x2000, scoped, tag = 'output window, operand 0, single buffered']
    #allocation3 [shape = 's32[1]{0}', space=sflag, size = 0x4, scoped, tag = 'scoped memory for forward.1']
    #allocation4 [shape = 'u8[8192]{0}', space=vmem, size = 0x2000, scoped, tag = 'output window, operand 1, single buffered']
    #allocation5 [shape = 's32[1]{0}', space=sflag, size = 0x4, scoped, tag = 'scoped memory for forward.1']
    #allocation6 [shape = 'u8[8192]{0}', space=vmem, size = 0x2000, scoped, tag = 'output window, operand 2, single buffered']
    #allocation7 [shape = 'u8[4096]{0}', space=vmem, size = 0x1000, scoped, tag = 'output window, operand 3, single buffered']
    #allocation8 [shape = 's32[1]{0}', space=sflag, size = 0x4, scoped, tag = 'scoped memory for forward.1']
    #allocation9 [shape = 'u8[4096]{0}', space=vmem, size = 0x1000, scoped, tag = 'output window, operand 4, single buffered']
    #allocation10 [shape = 'u8[4096]{0}', space=vmem, size = 0x1000, scoped, tag = 'output window, operand 5, single buffered']
    #allocation11 [shape = 's32[1]{0}', space=sflag, size = 0x4, scoped, tag = 'scoped memory for forward.1']
    #allocation12 [shape = 'u8[4096]{0}', space=vmem, size = 0x1000, scoped, tag = 'output window, operand 6, single buffered']
    #allocation13 [shape = 'u8[4096]{0}', space=vmem, size = 0x1000, scoped, tag = 'output window, operand 7, single buffered']
    #allocation14 [shape = 's32[1]{0}', space=sflag, size = 0x4, scoped, tag = 'scoped memory for forward.1']
    #allocation15 [shape = 'u8[4096]{0}', space=vmem, size = 0x1000, scoped, tag = 'output window, operand 8, single buffered']
    #allocation16 [shape = 'u8[4096]{0}', space=vmem, size = 0x1000, scoped, tag = 'output window, operand 9, single buffered']
    #allocation17 [shape = 's32[1]{0}', space=sflag, size = 0x4, scoped, tag = 'scoped memory for forward.1']
    #allocation18 [shape = 'u8[4096]{0}', space=vmem, size = 0x1000, scoped, tag = 'output window, operand 10, single buffered']
    #allocation19 [shape = 'u8[4096]{0}', space=vmem, size = 0x1000, scoped, tag = 'output window, operand 11, single buffered']
    #allocation20 [shape = 's32[1]{0}', space=sflag, size = 0x4, scoped, tag = 'scoped memory for forward.1']
    #allocation21 [shape = 'u8[512]{0}', space=vmem, size = 0x400, scoped, tag = 'output window, operand 12, single buffered']
    #allocation22 [shape = 'u8[512]{0}', space=vmem, size = 0x400, scoped, tag = 'output window, operand 13, single buffered']
    #allocation23 [shape = 's32[1]{0}', space=sflag, size = 0x4, scoped, tag = 'scoped memory for forward.1']
    %81 = vsyncpa [#allocation3], 0
    %82 = vsyncpa [#allocation5], 0
    %83 = vsyncpa [#allocation8], 0
    %84 = vsyncpa [#allocation11], 0
    %85 = vsyncpa [#allocation14], 0
    %86 = vsyncpa [#allocation17], 0
    %87 = vsyncpa [#allocation20], 0
    %88 = vsyncpa [#allocation23], 0
    // Predicated region
    $region2: #{forward.1} parent=1 // pred_check
      _
    $region3: #{forward.1} parent=1 // pred_check_branch
      %90 = sbr.rel (0) target = $region5
    $region4: #{forward.1} parent=1 // pred_region
      _
    $region5: #{forward.1} parent=1 // pred_fallthru
      _
    // Predicated region
    $region6: #{forward.1} parent=1 // pred_check
      _
    $region7: #{forward.1} parent=1 // pred_check_branch
      %92 = sbr.rel (0) target = $region9
    $region8: #{forward.1} parent=1 // pred_region
      _
    $region9: #{forward.1} parent=1 // pred_fallthru
      _
    // Predicated region
    $region10: #{forward.1} parent=1 // pred_check
      _
    $region11: #{forward.1} parent=1 // pred_check_branch
      %94 = sbr.rel (0) target = $region13
    $region12: #{forward.1} parent=1 // pred_region
      _
    $region13: #{forward.1} parent=1 // pred_fallthru
      _
    // Predicated region
    $region14: #{forward.1} parent=1 // pred_check
      _
    $region15: #{forward.1} parent=1 // pred_check_branch
      %96 = sbr.rel (0) target = $region17
    $region16: #{forward.1} parent=1 // pred_region
      _
    $region17: #{forward.1} parent=1 // pred_fallthru
      _
    // Predicated region
    $region18: #{forward.1} parent=1 // pred_check
      _
    $region19: #{forward.1} parent=1 // pred_check_branch
      %98 = sbr.rel (0) target = $region21
    $region20: #{forward.1} parent=1 // pred_region
      _
    $region21: #{forward.1} parent=1 // pred_fallthru
      _
    // Predicated region
    $region22: #{forward.1} parent=1 // pred_check
      _
    $region23: #{forward.1} parent=1 // pred_check_branch
      %100 = sbr.rel (0) target = $region25
    $region24: #{forward.1} parent=1 // pred_region
      _
    $region25: #{forward.1} parent=1 // pred_fallthru
      _
    // Predicated region
    $region26: #{forward.1} parent=1 // pred_check
      _
    $region27: #{forward.1} parent=1 // pred_check_branch
      %102 = sbr.rel (0) target = $region29
    $region28: #{forward.1} parent=1 // pred_region
      _
    $region29: #{forward.1} parent=1 // pred_fallthru
      _
    // Predicated region
    $region30: #{forward.1} parent=1 // pred_check
      _
    $region31: #{forward.1} parent=1 // pred_check_branch
      %104 = sbr.rel (0) target = $region33
    $region32: #{forward.1} parent=1 // pred_region
      _
    $region33: #{forward.1} parent=1 // pred_fallthru
      _
    // Predicated region
    $region34: #{forward.1} parent=1 // pred_check
      _
    $region35: #{forward.1} parent=1 // pred_check_branch
      %106 = sbr.rel (0) target = $region37
    $region36: #{forward.1} parent=1 // pred_region
      _
    $region37: #{forward.1} parent=1 // pred_fallthru
      _
    // Predicated region
    $region38: #{forward.1} parent=1 // pred_check
      _
    $region39: #{forward.1} parent=1 // pred_check_branch
      %108 = sbr.rel (0) target = $region41
    $region40: #{forward.1} parent=1 // pred_region
      _
    $region41: #{forward.1} parent=1 // pred_fallthru
      _
    // Predicated region
    $region42: #{forward.1} parent=1 // pred_check
      _
    $region43: #{forward.1} parent=1 // pred_check_branch
      %110 = sbr.rel (0) target = $region45
    $region44: #{forward.1} parent=1 // pred_region
      _
    $region45: #{forward.1} parent=1 // pred_fallthru
      _
    // Predicated region
    $region46: #{forward.1} parent=1 // pred_check
      _
    $region47: #{forward.1} parent=1 // pred_check_branch
      %112 = sbr.rel (0) target = $region49
    $region48: #{forward.1} parent=1 // pred_region
      _
    $region49: #{forward.1} parent=1 // pred_fallthru
      _
    // Predicated region
    $region50: #{forward.1} parent=1 // pred_check
      _
    $region51: #{forward.1} parent=1 // pred_check_branch
      %114 = sbr.rel (0) target = $region53
    $region52: #{forward.1} parent=1 // pred_region
      _
    $region53: #{forward.1} parent=1 // pred_fallthru
      _
    // Predicated region
    $region54: #{forward.1} parent=1 // pred_check
      _
    $region55: #{forward.1} parent=1 // pred_check_branch
      %116 = sbr.rel (0) target = $region57
    $region56: #{forward.1} parent=1 // pred_region
      _
    $region57: #{forward.1} parent=1 // pred_fallthru
      _
    // Predicated region
    $region58: #{forward.1} parent=1 // pred_check
      _
    $region59: #{forward.1} parent=1 // pred_check_branch
      %118 = sbr.rel (0) target = $region61
    $region60: #{forward.1} parent=1 // pred_region
      _
    $region61: #{forward.1} parent=1 // pred_fallthru
      _
    // Predicated region
    $region62: #{forward.1} parent=1 // pred_check
      _
    $region63: #{forward.1} parent=1 // pred_check_branch
      %120 = sbr.rel (0) target = $region65
    $region64: #{forward.1} parent=1 // pred_region
      _
    $region65: #{forward.1} parent=1 // pred_fallthru
      _
    // Predicated region
    $region66: #{forward.1} parent=1 // pred_check
      _
    $region67: #{forward.1} parent=1 // pred_check_branch
      %122 = sbr.rel (0) target = $region69
    $region68: #{forward.1} parent=1 // pred_region
      _
    $region69: #{forward.1} parent=1 // pred_fallthru
      _
    // Predicated region
    $region70: #{forward.1} parent=1 // pred_check
      _
    $region71: #{forward.1} parent=1 // pred_check_branch
      %124 = sbr.rel (0) target = $region73
    $region72: #{forward.1} parent=1 // pred_region
      _
    $region73: #{forward.1} parent=1 // pred_fallthru
      _
    // Predicated region
    $region74: #{forward.1} parent=1 // pred_check
      _
    $region75: #{forward.1} parent=1 // pred_check_branch
      %126 = sbr.rel (0) target = $region77
    $region76: #{forward.1} parent=1 // pred_region
      _
    $region77: #{forward.1} parent=1 // pred_fallthru
      _
    // Predicated region
    $region78: #{forward.1} parent=1 // pred_check
      _
    $region79: #{forward.1} parent=1 // pred_check_branch
      %128 = sbr.rel (0) target = $region81
    $region80: #{forward.1} parent=1 // pred_region
      _
    $region81: #{forward.1} parent=1 // pred_fallthru
      _
    // Predicated region
    $region82: #{forward.1} parent=1 // pred_check
      _
    $region83: #{forward.1} parent=1 // pred_check_branch
      %130 = sbr.rel (0) target = $region85
    $region84: #{forward.1} parent=1 // pred_region
      _
    $region85: #{forward.1} parent=1 // pred_fallthru
      _
    // Predicated region
    $region86: #{forward.1} parent=1 // pred_check
      _
    $region87: #{forward.1} parent=1 // pred_check_branch
      %132 = sbr.rel (0) target = $region89
    $region88: #{forward.1} parent=1 // pred_region
      _
    $region89: #{forward.1} parent=1 // pred_fallthru
      _
    // Predicated region
    $region90: #{forward.1} parent=1 // pred_check
      _
    $region91: #{forward.1} parent=1 // pred_check_branch
      %134 = sbr.rel (0) target = $region93
    $region92: #{forward.1} parent=1 // pred_region
      _
    $region93: #{forward.1} parent=1 // pred_fallthru
      _
    // Predicated region
    $region94: #{forward.1} parent=1 // pred_check
      _
    $region95: #{forward.1} parent=1 // pred_check_branch
      %136 = sbr.rel (0) target = $region97
    $region96: #{forward.1} parent=1 // pred_region
      _
    $region97: #{forward.1} parent=1 // pred_fallthru
      _
    %v138 = vld [vmem:[%s1] sm:$0xff]
    %v139 = vld [vmem:[%s3] sm:$0xff]
    %v140 = vmul.f32 %v138, %v139
    %vm141 = vcmask 523264
    %v142 = vsel %vm141, %v140, 0.0
    %143 = vadd.xlane.f32.xlu0 %v142
    %v144 = vpop.xlane.xlu0 %143
    %v145 = vmul.f32 %v138, %v144
    %v146 = vsub.f32 %v139, %v145
    %v147 = vld [vmem:[%s5] sm:$0xff]
    %v148 = vmul.f32 %v138, %v147
    %v149 = vsel %vm141, %v148, 0.0
    %150 = vadd.xlane.f32.xlu0 %v149
    %v151 = vpop.xlane.xlu0 %150
    %v152 = vmul.f32 %v138, %v151
    %v153 = vsub.f32 %v147, %v152
    %v154 = vld [vmem:[%s7] sm:$0xff]
    %v155 = vmul.f32 %v138, %v154
    %v156 = vsel %vm141, %v155, 0.0
    %157 = vadd.xlane.f32.xlu0 %v156
    %v158 = vpop.xlane.xlu0 %157
    %v159 = vmul.f32 %v138, %v158
    %v160 = vsub.f32 %v154, %v159
    %v161 = vld [vmem:[%s9] sm:$0xff]
    %v162 = vmul.f32 %v138, %v161
    %v163 = vsel %vm141, %v162, 0.0
    %164 = vadd.xlane.f32.xlu0 %v163
    %v165 = vpop.xlane.xlu0 %164
    %v166 = vmul.f32 %v138, %v165
    %v167 = vsub.f32 %v161, %v166
    %v168 = vld [vmem:[%s11] sm:$0xff]
    %v169 = vmul.f32 %v138, %v168
    %v170 = vsel %vm141, %v169, 0.0
    %171 = vadd.xlane.f32.xlu0 %v170
    %v172 = vpop.xlane.xlu0 %171
    %v173 = vmul.f32 %v138, %v172
    %v174 = vsub.f32 %v168, %v173
    %v175 = vld [vmem:[%s13] sm:$0xff]
    %v176 = vmul.f32 %v138, %v175
    %v177 = vsel %vm141, %v176, 0.0
    %178 = vadd.xlane.f32.xlu0 %v177
    %v179 = vpop.xlane.xlu0 %178
    %v180 = vmul.f32 %v138, %v179
    %v181 = vsub.f32 %v175, %v180
    %v182 = vld [vmem:[%s15] sm:$0xff]
    %v183 = vmul.f32 %v138, %v182
    %v184 = vsel %vm141, %v183, 0.0
    %185 = vadd.xlane.f32.xlu0 %v184
    %v186 = vpop.xlane.xlu0 %185
    %v187 = vmul.f32 %v138, %v186
    %v188 = vsub.f32 %v182, %v187
    %v189 = vld [vmem:[%s17] sm:$0xff]
    %v190 = vmul.f32 %v138, %v189
    %v191 = vsel %vm141, %v190, 0.0
    %192 = vadd.xlane.f32.xlu0 %v191
    %v193 = vpop.xlane.xlu0 %192
    %v194 = vmul.f32 %v138, %v193
    %v195 = vsub.f32 %v189, %v194
    %v196 = vld [vmem:[%s19] sm:$0xff]
    %v197 = vld [vmem:[%s21] sm:$0xff]
    %v198 = vmul.f32 %v196, %v197
    %v199 = vsel %vm141, %v198, 0.0
    %200 = vadd.xlane.f32.xlu0 %v199
    %v201 = vpop.xlane.xlu0 %200
    %v202 = vmul.f32 %v196, %v201
    %v203 = vsub.f32 %v197, %v202
    %v204 = vld [vmem:[%s23] sm:$0x1]
    %v206 = vlaneseq
    %v207 = vshrl.u32 %v206, 7
    %v208 = vsub.s32 0, %v207
    %v209 = vrot.slane %v204, %v208
    %v211 = vmul.f32 %v196, %v209
    %v212 = vsel %vm141, %v211, 0.0
    %213 = vadd.xlane.f32.xlu0 %v212
    %v214 = vpop.xlane.xlu0 %213
    %v215 = vmul.f32 %v196, %v214
    %v216 = vsub.f32 %v209, %v215
    %v217 = vmul.f32 %v146, %v146
    %219 = vrot.lane.b32.xlu0 %v217, 96
    %v220 = vpop.permute.xlu0 %219
    %v222 = vadd.f32 %v217, %v220
    %v223 = vrsqrt.pop %v222
    %v224 = vmul.f32 %v222, %v223
    %vm225 = vcmp.eq.f32.partialorder %v222, inf
    %v226 = vsel %vm225, %v222, %v224
    %vm227 = vcmp.eq.f32.partialorder %v222, 0.0
    %v228 = vand.u32 %v222, 2147483648
    %v229 = vsel %vm227, %v228, %v226
    %vm230 = vcmask 261120
    %231 = vst.msk [vmem:[#allocation9] sm:$0xff] %vm230, %v229
    %v232 = vmul.f32 %v153, %v153
    %234 = vrot.lane.b32.xlu0 %v232, 96
    %v235 = vpop.permute.xlu0 %234
    %v237 = vadd.f32 %v232, %v235
    %v238 = vrsqrt.pop %v237
    %v239 = vmul.f32 %v237, %v238
    %vm240 = vcmp.eq.f32.partialorder %v237, inf
    %v241 = vsel %vm240, %v237, %v239
    %vm242 = vcmp.eq.f32.partialorder %v237, 0.0
    %v243 = vand.u32 %v237, 2147483648
    %v244 = vsel %vm242, %v243, %v241
    %245 = vst.msk [vmem:[#allocation10] sm:$0xff] %vm230, %v244
    %v246 = vmul.f32 %v174, %v174
    %248 = vrot.lane.b32.xlu0 %v246, 96
    %v249 = vpop.permute.xlu0 %248
    %v251 = vadd.f32 %v246, %v249
    %v252 = vrsqrt.pop %v251
    %v253 = vmul.f32 %v251, %v252
    %vm254 = vcmp.eq.f32.partialorder %v251, inf
    %v255 = vsel %vm254, %v251, %v253
    %vm256 = vcmp.eq.f32.partialorder %v251, 0.0
    %v257 = vand.u32 %v251, 2147483648
    %v258 = vsel %vm256, %v257, %v255
    %259 = vst.msk [vmem:[#allocation12] sm:$0xff] %vm230, %v258
    %v260 = vmul.f32 %v167, %v167
    %262 = vrot.lane.b32.xlu0 %v260, 96
    %v263 = vpop.permute.xlu0 %262
    %v265 = vadd.f32 %v260, %v263
    %v266 = vrsqrt.pop %v265
    %v267 = vmul.f32 %v265, %v266
    %vm268 = vcmp.eq.f32.partialorder %v265, inf
    %v269 = vsel %vm268, %v265, %v267
    %vm270 = vcmp.eq.f32.partialorder %v265, 0.0
    %v271 = vand.u32 %v265, 2147483648
    %v272 = vsel %vm270, %v271, %v269
    %273 = vst.msk [vmem:[#allocation13] sm:$0xff] %vm230, %v272
    %v274 = vmul.f32 %v160, %v160
    %276 = vrot.lane.b32.xlu0 %v274, 96
    %v277 = vpop.permute.xlu0 %276
    %v279 = vadd.f32 %v274, %v277
    %v280 = vrsqrt.pop %v279
    %v281 = vmul.f32 %v279, %v280
    %vm282 = vcmp.eq.f32.partialorder %v279, inf
    %v283 = vsel %vm282, %v279, %v281
    %vm284 = vcmp.eq.f32.partialorder %v279, 0.0
    %v285 = vand.u32 %v279, 2147483648
    %v286 = vsel %vm284, %v285, %v283
    %287 = vst.msk [vmem:[#allocation15] sm:$0xff] %vm230, %v286
    %v288 = vmul.f32 %v181, %v181
    %290 = vrot.lane.b32.xlu0 %v288, 96
    %v291 = vpop.permute.xlu0 %290
    %v293 = vadd.f32 %v288, %v291
    %v294 = vrsqrt.pop %v293
    %v295 = vmul.f32 %v293, %v294
    %vm296 = vcmp.eq.f32.partialorder %v293, inf
    %v297 = vsel %vm296, %v293, %v295
    %vm298 = vcmp.eq.f32.partialorder %v293, 0.0
    %v299 = vand.u32 %v293, 2147483648
    %v300 = vsel %vm298, %v299, %v297
    %301 = vst.msk [vmem:[#allocation16] sm:$0xff] %vm230, %v300
    %v302 = vmul.f32 %v188, %v188
    %304 = vrot.lane.b32.xlu0 %v302, 96
    %v305 = vpop.permute.xlu0 %304
    %v307 = vadd.f32 %v302, %v305
    %v308 = vrsqrt.pop %v307
    %v309 = vmul.f32 %v307, %v308
    %vm310 = vcmp.eq.f32.partialorder %v307, inf
    %v311 = vsel %vm310, %v307, %v309
    %vm312 = vcmp.eq.f32.partialorder %v307, 0.0
    %v313 = vand.u32 %v307, 2147483648
    %v314 = vsel %vm312, %v313, %v311
    %315 = vst.msk [vmem:[#allocation18] sm:$0xff] %vm230, %v314
    %v316 = vmul.f32 %v195, %v195
    %318 = vrot.lane.b32.xlu0 %v316, 96
    %v319 = vpop.permute.xlu0 %318
    %v321 = vadd.f32 %v316, %v319
    %v322 = vrsqrt.pop %v321
    %v323 = vmul.f32 %v321, %v322
    %vm324 = vcmp.eq.f32.partialorder %v321, inf
    %v325 = vsel %vm324, %v321, %v323
    %vm326 = vcmp.eq.f32.partialorder %v321, 0.0
    %v327 = vand.u32 %v321, 2147483648
    %v328 = vsel %vm326, %v327, %v325
    %329 = vst.msk [vmem:[#allocation19] sm:$0xff] %vm230, %v328
    %v330 = vld [vmem:[%s33] sm:$0xff]
    %v331 = vld [vmem:[%s33 + $0x8] sm:$0xff]
    %v332 = vld [vmem:[%s33 + $0x10] sm:$0xff]
    %v333 = vld [vmem:[%s33 + $0x18] sm:$0xff]
    %v334 = vld [vmem:[%s33 + $0x20] sm:$0xff]
    %v335 = vld [vmem:[%s33 + $0x28] sm:$0xff]
    %v336 = vld [vmem:[%s33 + $0x30] sm:$0xff]
    %v337 = vld [vmem:[%s33 + $0x38] sm:$0xff]
    %v338 = vld [vmem:[%s33 + $0x40] sm:$0xff]
    %v339 = vld [vmem:[%s33 + $0x48] sm:$0xff]
    %v340 = vld [vmem:[%s33 + $0x50] sm:$0xff]
    %v341 = vld [vmem:[%s33 + $0x58] sm:$0xff]
    %v342 = vld [vmem:[%s33 + $0x60] sm:$0xff]
    %v343 = vld [vmem:[%s33 + $0x68] sm:$0xff]
    %v344 = vld [vmem:[%s33 + $0x70] sm:$0xff]
    %v345 = vld [vmem:[%s33 + $0x78] sm:$0xff]
    %v346 = vld [vmem:[%s33 + $0x80] sm:$0xff]
    %v347 = vld [vmem:[%s33 + $0x88] sm:$0xff]
    %v348 = vld [vmem:[%s33 + $0x90] sm:$0xff]
    %v349 = vld [vmem:[%s33 + $0x98] sm:$0xff]
    %v350 = vld [vmem:[%s33 + $0xa0] sm:$0xff]
    %v351 = vld [vmem:[%s33 + $0xa8] sm:$0xff]
    %v352 = vld [vmem:[%s33 + $0xb0] sm:$0xff]
    %v353 = vld [vmem:[%s33 + $0xb8] sm:$0xff]
    %v354 = vld [vmem:[%s33 + $0xc0] sm:$0xff]
    %v355 = vld [vmem:[%s33 + $0xc8] sm:$0xff]
    %v356 = vld [vmem:[%s33 + $0xd0] sm:$0xff]
    %v357 = vld [vmem:[%s33 + $0xd8] sm:$0xff]
    %v358 = vld [vmem:[%s33 + $0xe0] sm:$0xff]
    %v359 = vld [vmem:[%s33 + $0xe8] sm:$0xff]
    %v360 = vld [vmem:[%s33 + $0xf0] sm:$0xff]
    %v361 = vld [vmem:[%s33 + $0xf8] sm:$0xff]
    %v362 = vld [vmem:[%s35] sm:$0xff]
    %v363 = vld [vmem:[%s35 + $0x8] sm:$0xff]
    %v364 = vld [vmem:[%s35 + $0x10] sm:$0xff]
    %v365 = vld [vmem:[%s35 + $0x18] sm:$0xff]
    %v366 = vld [vmem:[%s35 + $0x20] sm:$0xff]
    %v367 = vld [vmem:[%s35 + $0x28] sm:$0xff]
    %v368 = vld [vmem:[%s35 + $0x30] sm:$0xff]
    %v369 = vld [vmem:[%s35 + $0x38] sm:$0xff]
    %v370 = vld [vmem:[%s35 + $0x40] sm:$0xff]
    %v371 = vld [vmem:[%s35 + $0x48] sm:$0xff]
    %v372 = vld [vmem:[%s35 + $0x50] sm:$0xff]
    %v373 = vld [vmem:[%s35 + $0x58] sm:$0xff]
    %v374 = vld [vmem:[%s35 + $0x60] sm:$0xff]
    %v375 = vld [vmem:[%s35 + $0x68] sm:$0xff]
    %v376 = vld [vmem:[%s35 + $0x70] sm:$0xff]
    %v377 = vld [vmem:[%s35 + $0x78] sm:$0xff]
    %v378 = vld [vmem:[%s35 + $0x80] sm:$0xff]
    %v379 = vld [vmem:[%s35 + $0x88] sm:$0xff]
    %v380 = vld [vmem:[%s35 + $0x90] sm:$0xff]
    %v381 = vld [vmem:[%s35 + $0x98] sm:$0xff]
    %v382 = vld [vmem:[%s35 + $0xa0] sm:$0xff]
    %v383 = vld [vmem:[%s35 + $0xa8] sm:$0xff]
    %v384 = vld [vmem:[%s35 + $0xb0] sm:$0xff]
    %v385 = vld [vmem:[%s35 + $0xb8] sm:$0xff]
    %v386 = vld [vmem:[%s35 + $0xc0] sm:$0xff]
    %v387 = vld [vmem:[%s35 + $0xc8] sm:$0xff]
    %v388 = vld [vmem:[%s35 + $0xd0] sm:$0xff]
    %v389 = vld [vmem:[%s35 + $0xd8] sm:$0xff]
    %v390 = vld [vmem:[%s35 + $0xe0] sm:$0xff]
    %v391 = vld [vmem:[%s35 + $0xe8] sm:$0xff]
    %v392 = vld [vmem:[%s35 + $0xf0] sm:$0xff]
    %v393 = vld [vmem:[%s35 + $0xf8] sm:$0xff]
    %v395 = vsel %vm141, %v181, 0
    %397 = vmatprep.subr.mxu0 %v363
    %398 = vmatpush1.msra.mxu0 %v362
    %399 = vmatprep.subr.mxu0 %v367
    %400 = vmatpush1.msra.mxu0 %v366
    %401 = vmatprep.subr.mxu0 %v371
    %402 = vmatpush1.msra.mxu0 %v370
    %403 = vmatprep.subr.mxu0 %v375
    %404 = vmatpush1.msra.mxu0 %v374
    %405 = vmatprep.subr.mxu0 %v379
    %406 = vmatpush1.msra.mxu0 %v378
    %407 = vmatprep.subr.mxu0 %v383
    %408 = vmatpush1.msra.mxu0 %v382
    %409 = vmatprep.subr.mxu0 %v387
    %410 = vmatpush1.msra.mxu0 %v386
    %411 = vmatprep.subr.mxu0 %v391
    %412 = vmatpush1.msra.mxu0 %v390
    %413 = vmatprep.subr.mxu0 0.0
    %414 = vmatpush1.msra.mxu0 0.0
    %415 = vmatprep.subr.mxu0 0.0
    %416 = vmatpush1.msra.mxu0 0.0
    %417 = vmatprep.subr.mxu0 0.0
    %418 = vmatpush1.msra.mxu0 0.0
    %419 = vmatprep.subr.mxu0 0.0
    %420 = vmatpush1.msra.mxu0 0.0
    %421 = vmatprep.subr.mxu0 0.0
    %422 = vmatpush1.msra.mxu0 0.0
    %423 = vmatprep.subr.mxu0 0.0
    %424 = vmatpush1.msra.mxu0 0.0
    %425 = vmatprep.subr.mxu0 0.0
    %426 = vmatpush1.msra.mxu0 0.0
    %427 = vmatprep.subr.mxu0 0.0
    %428 = vmatpush1.msra.mxu0 0.0
    %429 = vmatprep.subr.mxu0 0.0
    %430 = vmatpush1.msra.mxu0 0.0
    %431 = vmatprep.subr.mxu0 0.0
    %432 = vmatpush1.msra.mxu0 0.0
    %433 = vmatprep.subr.mxu0 0.0
    %434 = vmatpush1.msra.mxu0 0.0
    %435 = vmatprep.subr.mxu0 0.0
    %436 = vmatpush1.msra.mxu0 0.0
    %437 = vmatprep.subr.mxu0 0.0
    %438 = vmatpush1.msra.mxu0 0.0
    %439 = vmatprep.subr.mxu0 0.0
    %440 = vmatpush1.msra.mxu0 0.0
    %441 = vmatprep.subr.mxu0 0.0
    %442 = vmatpush1.msra.mxu0 0.0
    %443 = vmatprep.subr.mxu0 0.0
    %444 = vmatpush1.msra.mxu0 0.0
    %445 = vmatprep.subr.mxu0 0.0
    %446 = vmatpush1.msra.mxu0 0.0
    %447 = vmatprep.subr.mxu0 0.0
    %448 = vmatpush1.msra.mxu0 0.0
    %449 = vmatprep.subr.mxu0 0.0
    %450 = vmatpush1.msra.mxu0 0.0
    %451 = vmatprep.subr.mxu0 0.0
    %452 = vmatpush1.msra.mxu0 0.0
    %453 = vmatprep.subr.mxu0 0.0
    %454 = vmatpush1.msra.mxu0 0.0
    %455 = vmatprep.subr.mxu0 0.0
    %456 = vmatpush1.msra.mxu0 0.0
    %457 = vmatprep.subr.mxu0 0.0
    %458 = vmatpush1.msra.mxu0 0.0
    %459 = vmatprep.subr.mxu0 0.0
    %460 = vmatpush1.msra.mxu0 0.0
    %461 = vmatprep.mubr.f32.mxu0 0.0
    %462 = vmatmul.mubr.f32.gmra.mrb[0].mxu0 %v395
    %v463 = vpop.f32.mrb[0].mxu0
    %v464 = vadd.f32 0.0, %v463
    %v465 = vpop.f32.mrb[0].mxu0
    %v466 = vadd.f32 0.0, %v465
    %467 = vdwg.mxu0
    %468 = vmatprep.subr.mxu0 %v365
    %469 = vmatpush1.msra.mxu0 %v364
    %470 = vmatprep.subr.mxu0 %v369
    %471 = vmatpush1.msra.mxu0 %v368
    %472 = vmatprep.subr.mxu0 %v373
    %473 = vmatpush1.msra.mxu0 %v372
    %474 = vmatprep.subr.mxu0 %v377
    %475 = vmatpush1.msra.mxu0 %v376
    %476 = vmatprep.subr.mxu0 %v381
    %477 = vmatpush1.msra.mxu0 %v380
    %478 = vmatprep.subr.mxu0 %v385
    %479 = vmatpush1.msra.mxu0 %v384
    %480 = vmatprep.subr.mxu0 %v389
    %481 = vmatpush1.msra.mxu0 %v388
    %482 = vmatprep.subr.mxu0 %v393
    %483 = vmatpush1.msra.mxu0 %v392
    %484 = vmatprep.subr.mxu0 0.0
    %485 = vmatpush1.msra.mxu0 0.0
    %486 = vmatprep.subr.mxu0 0.0
    %487 = vmatpush1.msra.mxu0 0.0
    %488 = vmatprep.subr.mxu0 0.0
    %489 = vmatpush1.msra.mxu0 0.0
    %490 = vmatprep.subr.mxu0 0.0
    %491 = vmatpush1.msra.mxu0 0.0
    %492 = vmatprep.subr.mxu0 0.0
    %493 = vmatpush1.msra.mxu0 0.0
    %494 = vmatprep.subr.mxu0 0.0
    %495 = vmatpush1.msra.mxu0 0.0
    %496 = vmatprep.subr.mxu0 0.0
    %497 = vmatpush1.msra.mxu0 0.0
    %498 = vmatprep.subr.mxu0 0.0
    %499 = vmatpush1.msra.mxu0 0.0
    %500 = vmatprep.subr.mxu0 0.0
    %501 = vmatpush1.msra.mxu0 0.0
    %502 = vmatprep.subr.mxu0 0.0
    %503 = vmatpush1.msra.mxu0 0.0
    %504 = vmatprep.subr.mxu0 0.0
    %505 = vmatpush1.msra.mxu0 0.0
    %506 = vmatprep.subr.mxu0 0.0
    %507 = vmatpush1.msra.mxu0 0.0
    %508 = vmatprep.subr.mxu0 0.0
    %509 = vmatpush1.msra.mxu0 0.0
    %510 = vmatprep.subr.mxu0 0.0
    %511 = vmatpush1.msra.mxu0 0.0
    %512 = vmatprep.subr.mxu0 0.0
    %513 = vmatpush1.msra.mxu0 0.0
    %514 = vmatprep.subr.mxu0 0.0
    %515 = vmatpush1.msra.mxu0 0.0
    %516 = vmatprep.subr.mxu0 0.0
    %517 = vmatpush1.msra.mxu0 0.0
    %518 = vmatprep.subr.mxu0 0.0
    %519 = vmatpush1.msra.mxu0 0.0
    %520 = vmatprep.subr.mxu0 0.0
    %521 = vmatpush1.msra.mxu0 0.0
    %522 = vmatprep.subr.mxu0 0.0
    %523 = vmatpush1.msra.mxu0 0.0
    %524 = vmatprep.subr.mxu0 0.0
    %525 = vmatpush1.msra.mxu0 0.0
    %526 = vmatprep.subr.mxu0 0.0
    %527 = vmatpush1.msra.mxu0 0.0
    %528 = vmatprep.subr.mxu0 0.0
    %529 = vmatpush1.msra.mxu0 0.0
    %530 = vmatprep.subr.mxu0 0.0
    %531 = vmatpush1.msra.mxu0 0.0
    %532 = vmatprep.mubr.f32.mxu0 0.0
    %533 = vmatmul.mubr.f32.gmra.mrb[0].mxu0 %v395
    %v534 = vpop.f32.mrb[0].mxu0
    %v535 = vadd.f32 0.0, %v534
    %v536 = vpop.f32.mrb[0].mxu0
    %v537 = vadd.f32 0.0, %v536
    %538 = vdwg.mxu0
    %v540 = vsel %vm141, %v174, 0
    %542 = vmatprep.subr.mxu0 %v331
    %543 = vmatpush1.msra.mxu0 %v330
    %544 = vmatprep.subr.mxu0 %v335
    %545 = vmatpush1.msra.mxu0 %v334
    %546 = vmatprep.subr.mxu0 %v339
    %547 = vmatpush1.msra.mxu0 %v338
    %548 = vmatprep.subr.mxu0 %v343
    %549 = vmatpush1.msra.mxu0 %v342
    %550 = vmatprep.subr.mxu0 %v347
    %551 = vmatpush1.msra.mxu0 %v346
    %552 = vmatprep.subr.mxu0 %v351
    %553 = vmatpush1.msra.mxu0 %v350
    %554 = vmatprep.subr.mxu0 %v355
    %555 = vmatpush1.msra.mxu0 %v354
    %556 = vmatprep.subr.mxu0 %v359
    %557 = vmatpush1.msra.mxu0 %v358
    %558 = vmatprep.subr.mxu0 0.0
    %559 = vmatpush1.msra.mxu0 0.0
    %560 = vmatprep.subr.mxu0 0.0
    %561 = vmatpush1.msra.mxu0 0.0
    %562 = vmatprep.subr.mxu0 0.0
    %563 = vmatpush1.msra.mxu0 0.0
    %564 = vmatprep.subr.mxu0 0.0
    %565 = vmatpush1.msra.mxu0 0.0
    %566 = vmatprep.subr.mxu0 0.0
    %567 = vmatpush1.msra.mxu0 0.0
    %568 = vmatprep.subr.mxu0 0.0
    %569 = vmatpush1.msra.mxu0 0.0
    %570 = vmatprep.subr.mxu0 0.0
    %571 = vmatpush1.msra.mxu0 0.0
    %572 = vmatprep.subr.mxu0 0.0
    %573 = vmatpush1.msra.mxu0 0.0
    %574 = vmatprep.subr.mxu0 0.0
    %575 = vmatpush1.msra.mxu0 0.0
    %576 = vmatprep.subr.mxu0 0.0
    %577 = vmatpush1.msra.mxu0 0.0
    %578 = vmatprep.subr.mxu0 0.0
    %579 = vmatpush1.msra.mxu0 0.0
    %580 = vmatprep.subr.mxu0 0.0
    %581 = vmatpush1.msra.mxu0 0.0
    %582 = vmatprep.subr.mxu0 0.0
    %583 = vmatpush1.msra.mxu0 0.0
    %584 = vmatprep.subr.mxu0 0.0
    %585 = vmatpush1.msra.mxu0 0.0
    %586 = vmatprep.subr.mxu0 0.0
    %587 = vmatpush1.msra.mxu0 0.0
    %588 = vmatprep.subr.mxu0 0.0
    %589 = vmatpush1.msra.mxu0 0.0
    %590 = vmatprep.subr.mxu0 0.0
    %591 = vmatpush1.msra.mxu0 0.0
    %592 = vmatprep.subr.mxu0 0.0
    %593 = vmatpush1.msra.mxu0 0.0
    %594 = vmatprep.subr.mxu0 0.0
    %595 = vmatpush1.msra.mxu0 0.0
    %596 = vmatprep.subr.mxu0 0.0
    %597 = vmatpush1.msra.mxu0 0.0
    %598 = vmatprep.subr.mxu0 0.0
    %599 = vmatpush1.msra.mxu0 0.0
    %600 = vmatprep.subr.mxu0 0.0
    %601 = vmatpush1.msra.mxu0 0.0
    %602 = vmatprep.subr.mxu0 0.0
    %603 = vmatpush1.msra.mxu0 0.0
    %604 = vmatprep.subr.mxu0 0.0
    %605 = vmatpush1.msra.mxu0 0.0
    %606 = vmatprep.mubr.f32.mxu0 0.0
    %607 = vmatmul.mubr.f32.gmra.mrb[0].mxu0 %v540
    %v608 = vpop.f32.mrb[0].mxu0
    %v609 = vadd.f32 %v464, %v608
    %v610 = vpop.f32.mrb[0].mxu0
    %v611 = vadd.f32 %v466, %v610
    %612 = vdwg.mxu0
    %613 = vmatprep.subr.mxu0 %v333
    %614 = vmatpush1.msra.mxu0 %v332
    %615 = vmatprep.subr.mxu0 %v337
    %616 = vmatpush1.msra.mxu0 %v336
    %617 = vmatprep.subr.mxu0 %v341
    %618 = vmatpush1.msra.mxu0 %v340
    %619 = vmatprep.subr.mxu0 %v345
    %620 = vmatpush1.msra.mxu0 %v344
    %621 = vmatprep.subr.mxu0 %v349
    %622 = vmatpush1.msra.mxu0 %v348
    %623 = vmatprep.subr.mxu0 %v353
    %624 = vmatpush1.msra.mxu0 %v352
    %625 = vmatprep.subr.mxu0 %v357
    %626 = vmatpush1.msra.mxu0 %v356
    %627 = vmatprep.subr.mxu0 %v361
    %628 = vmatpush1.msra.mxu0 %v360
    %629 = vmatprep.subr.mxu0 0.0
    %630 = vmatpush1.msra.mxu0 0.0
    %631 = vmatprep.subr.mxu0 0.0
    %632 = vmatpush1.msra.mxu0 0.0
    %633 = vmatprep.subr.mxu0 0.0
    %634 = vmatpush1.msra.mxu0 0.0
    %635 = vmatprep.subr.mxu0 0.0
    %636 = vmatpush1.msra.mxu0 0.0
    %637 = vmatprep.subr.mxu0 0.0
    %638 = vmatpush1.msra.mxu0 0.0
    %639 = vmatprep.subr.mxu0 0.0
    %640 = vmatpush1.msra.mxu0 0.0
    %641 = vmatprep.subr.mxu0 0.0
    %642 = vmatpush1.msra.mxu0 0.0
    %643 = vmatprep.subr.mxu0 0.0
    %644 = vmatpush1.msra.mxu0 0.0
    %645 = vmatprep.subr.mxu0 0.0
    %646 = vmatpush1.msra.mxu0 0.0
    %647 = vmatprep.subr.mxu0 0.0
    %648 = vmatpush1.msra.mxu0 0.0
    %649 = vmatprep.subr.mxu0 0.0
    %650 = vmatpush1.msra.mxu0 0.0
    %651 = vmatprep.subr.mxu0 0.0
    %652 = vmatpush1.msra.mxu0 0.0
    %653 = vmatprep.subr.mxu0 0.0
    %654 = vmatpush1.msra.mxu0 0.0
    %655 = vmatprep.subr.mxu0 0.0
    %656 = vmatpush1.msra.mxu0 0.0
    %657 = vmatprep.subr.mxu0 0.0
    %658 = vmatpush1.msra.mxu0 0.0
    %659 = vmatprep.subr.mxu0 0.0
    %660 = vmatpush1.msra.mxu0 0.0
    %661 = vmatprep.subr.mxu0 0.0
    %662 = vmatpush1.msra.mxu0 0.0
    %663 = vmatprep.subr.mxu0 0.0
    %664 = vmatpush1.msra.mxu0 0.0
    %665 = vmatprep.subr.mxu0 0.0
    %666 = vmatpush1.msra.mxu0 0.0
    %667 = vmatprep.subr.mxu0 0.0
    %668 = vmatpush1.msra.mxu0 0.0
    %669 = vmatprep.subr.mxu0 0.0
    %670 = vmatpush1.msra.mxu0 0.0
    %671 = vmatprep.subr.mxu0 0.0
    %672 = vmatpush1.msra.mxu0 0.0
    %673 = vmatprep.subr.mxu0 0.0
    %674 = vmatpush1.msra.mxu0 0.0
    %675 = vmatprep.subr.mxu0 0.0
    %676 = vmatpush1.msra.mxu0 0.0
    %677 = vmatprep.mubr.f32.mxu0 0.0
    %678 = vmatmul.mubr.f32.gmra.mrb[0].mxu0 %v540
    %v679 = vpop.f32.mrb[0].mxu0
    %v680 = vadd.f32 %v535, %v679
    %v681 = vpop.f32.mrb[0].mxu0
    %v682 = vadd.f32 %v537, %v681
    %683 = vdwg.mxu0
    %v684 = vld [vmem:[%s37] sm:$0xff]
    %v685 = vld [vmem:[%s37 + $0x8] sm:$0xff]
    %v686 = vld [vmem:[%s37 + $0x10] sm:$0xff]
    %v687 = vld [vmem:[%s37 + $0x18] sm:$0xff]
    %v688 = vld [vmem:[%s37 + $0x20] sm:$0xff]
    %v689 = vld [vmem:[%s37 + $0x28] sm:$0xff]
    %v690 = vld [vmem:[%s37 + $0x30] sm:$0xff]
    %v691 = vld [vmem:[%s37 + $0x38] sm:$0xff]
    %v692 = vld [vmem:[%s37 + $0x40] sm:$0xff]
    %v693 = vld [vmem:[%s37 + $0x48] sm:$0xff]
    %v694 = vld [vmem:[%s37 + $0x50] sm:$0xff]
    %v695 = vld [vmem:[%s37 + $0x58] sm:$0xff]
    %v696 = vld [vmem:[%s37 + $0x60] sm:$0xff]
    %v697 = vld [vmem:[%s37 + $0x68] sm:$0xff]
    %v698 = vld [vmem:[%s37 + $0x70] sm:$0xff]
    %v699 = vld [vmem:[%s37 + $0x78] sm:$0xff]
    %v700 = vld [vmem:[%s37 + $0x80] sm:$0xff]
    %v701 = vld [vmem:[%s37 + $0x88] sm:$0xff]
    %v702 = vld [vmem:[%s37 + $0x90] sm:$0xff]
    %v703 = vld [vmem:[%s37 + $0x98] sm:$0xff]
    %v704 = vld [vmem:[%s37 + $0xa0] sm:$0xff]
    %v705 = vld [vmem:[%s37 + $0xa8] sm:$0xff]
    %v706 = vld [vmem:[%s37 + $0xb0] sm:$0xff]
    %v707 = vld [vmem:[%s37 + $0xb8] sm:$0xff]
    %v708 = vld [vmem:[%s37 + $0xc0] sm:$0xff]
    %v709 = vld [vmem:[%s37 + $0xc8] sm:$0xff]
    %v710 = vld [vmem:[%s37 + $0xd0] sm:$0xff]
    %v711 = vld [vmem:[%s37 + $0xd8] sm:$0xff]
    %v712 = vld [vmem:[%s37 + $0xe0] sm:$0xff]
    %v713 = vld [vmem:[%s37 + $0xe8] sm:$0xff]
    %v714 = vld [vmem:[%s37 + $0xf0] sm:$0xff]
    %v715 = vld [vmem:[%s37 + $0xf8] sm:$0xff]
    %v717 = vsel %vm141, %v167, 0
    %719 = vmatprep.subr.mxu0 %v685
    %720 = vmatpush1.msra.mxu0 %v684
    %721 = vmatprep.subr.mxu0 %v689
    %722 = vmatpush1.msra.mxu0 %v688
    %723 = vmatprep.subr.mxu0 %v693
    %724 = vmatpush1.msra.mxu0 %v692
    %725 = vmatprep.subr.mxu0 %v697
    %726 = vmatpush1.msra.mxu0 %v696
    %727 = vmatprep.subr.mxu0 %v701
    %728 = vmatpush1.msra.mxu0 %v700
    %729 = vmatprep.subr.mxu0 %v705
    %730 = vmatpush1.msra.mxu0 %v704
    %731 = vmatprep.subr.mxu0 %v709
    %732 = vmatpush1.msra.mxu0 %v708
    %733 = vmatprep.subr.mxu0 %v713
    %734 = vmatpush1.msra.mxu0 %v712
    %735 = vmatprep.subr.mxu0 0.0
    %736 = vmatpush1.msra.mxu0 0.0
    %737 = vmatprep.subr.mxu0 0.0
    %738 = vmatpush1.msra.mxu0 0.0
    %739 = vmatprep.subr.mxu0 0.0
    %740 = vmatpush1.msra.mxu0 0.0
    %741 = vmatprep.subr.mxu0 0.0
    %742 = vmatpush1.msra.mxu0 0.0
    %743 = vmatprep.subr.mxu0 0.0
    %744 = vmatpush1.msra.mxu0 0.0
    %745 = vmatprep.subr.mxu0 0.0
    %746 = vmatpush1.msra.mxu0 0.0
    %747 = vmatprep.subr.mxu0 0.0
    %748 = vmatpush1.msra.mxu0 0.0
    %749 = vmatprep.subr.mxu0 0.0
    %750 = vmatpush1.msra.mxu0 0.0
    %751 = vmatprep.subr.mxu0 0.0
    %752 = vmatpush1.msra.mxu0 0.0
    %753 = vmatprep.subr.mxu0 0.0
    %754 = vmatpush1.msra.mxu0 0.0
    %755 = vmatprep.subr.mxu0 0.0
    %756 = vmatpush1.msra.mxu0 0.0
    %757 = vmatprep.subr.mxu0 0.0
    %758 = vmatpush1.msra.mxu0 0.0
    %759 = vmatprep.subr.mxu0 0.0
    %760 = vmatpush1.msra.mxu0 0.0
    %761 = vmatprep.subr.mxu0 0.0
    %762 = vmatpush1.msra.mxu0 0.0
    %763 = vmatprep.subr.mxu0 0.0
    %764 = vmatpush1.msra.mxu0 0.0
    %765 = vmatprep.subr.mxu0 0.0
    %766 = vmatpush1.msra.mxu0 0.0
    %767 = vmatprep.subr.mxu0 0.0
    %768 = vmatpush1.msra.mxu0 0.0
    %769 = vmatprep.subr.mxu0 0.0
    %770 = vmatpush1.msra.mxu0 0.0
    %771 = vmatprep.subr.mxu0 0.0
    %772 = vmatpush1.msra.mxu0 0.0
    %773 = vmatprep.subr.mxu0 0.0
    %774 = vmatpush1.msra.mxu0 0.0
    %775 = vmatprep.subr.mxu0 0.0
    %776 = vmatpush1.msra.mxu0 0.0
    %777 = vmatprep.subr.mxu0 0.0
    %778 = vmatpush1.msra.mxu0 0.0
    %779 = vmatprep.subr.mxu0 0.0
    %780 = vmatpush1.msra.mxu0 0.0
    %781 = vmatprep.subr.mxu0 0.0
    %782 = vmatpush1.msra.mxu0 0.0
    %783 = vmatprep.mubr.f32.mxu0 0.0
    %784 = vmatmul.mubr.f32.gmra.mrb[0].mxu0 %v717
    %v785 = vpop.f32.mrb[0].mxu0
    %v786 = vadd.f32 0.0, %v785
    %v787 = vpop.f32.mrb[0].mxu0
    %v788 = vadd.f32 0.0, %v787
    %789 = vdwg.mxu0
    %790 = vmatprep.subr.mxu0 %v687
    %791 = vmatpush1.msra.mxu0 %v686
    %792 = vmatprep.subr.mxu0 %v691
    %793 = vmatpush1.msra.mxu0 %v690
    %794 = vmatprep.subr.mxu0 %v695
    %795 = vmatpush1.msra.mxu0 %v694
    %796 = vmatprep.subr.mxu0 %v699
    %797 = vmatpush1.msra.mxu0 %v698
    %798 = vmatprep.subr.mxu0 %v703
    %799 = vmatpush1.msra.mxu0 %v702
    %800 = vmatprep.subr.mxu0 %v707
    %801 = vmatpush1.msra.mxu0 %v706
    %802 = vmatprep.subr.mxu0 %v711
    %803 = vmatpush1.msra.mxu0 %v710
    %804 = vmatprep.subr.mxu0 %v715
    %805 = vmatpush1.msra.mxu0 %v714
    %806 = vmatprep.subr.mxu0 0.0
    %807 = vmatpush1.msra.mxu0 0.0
    %808 = vmatprep.subr.mxu0 0.0
    %809 = vmatpush1.msra.mxu0 0.0
    %810 = vmatprep.subr.mxu0 0.0
    %811 = vmatpush1.msra.mxu0 0.0
    %812 = vmatprep.subr.mxu0 0.0
    %813 = vmatpush1.msra.mxu0 0.0
    %814 = vmatprep.subr.mxu0 0.0
    %815 = vmatpush1.msra.mxu0 0.0
    %816 = vmatprep.subr.mxu0 0.0
    %817 = vmatpush1.msra.mxu0 0.0
    %818 = vmatprep.subr.mxu0 0.0
    %819 = vmatpush1.msra.mxu0 0.0
    %820 = vmatprep.subr.mxu0 0.0
    %821 = vmatpush1.msra.mxu0 0.0
    %822 = vmatprep.subr.mxu0 0.0
    %823 = vmatpush1.msra.mxu0 0.0
    %824 = vmatprep.subr.mxu0 0.0
    %825 = vmatpush1.msra.mxu0 0.0
    %826 = vmatprep.subr.mxu0 0.0
    %827 = vmatpush1.msra.mxu0 0.0
    %828 = vmatprep.subr.mxu0 0.0
    %829 = vmatpush1.msra.mxu0 0.0
    %830 = vmatprep.subr.mxu0 0.0
    %831 = vmatpush1.msra.mxu0 0.0
    %832 = vmatprep.subr.mxu0 0.0
    %833 = vmatpush1.msra.mxu0 0.0
    %834 = vmatprep.subr.mxu0 0.0
    %835 = vmatpush1.msra.mxu0 0.0
    %836 = vmatprep.subr.mxu0 0.0
    %837 = vmatpush1.msra.mxu0 0.0
    %838 = vmatprep.subr.mxu0 0.0
    %839 = vmatpush1.msra.mxu0 0.0
    %840 = vmatprep.subr.mxu0 0.0
    %841 = vmatpush1.msra.mxu0 0.0
    %842 = vmatprep.subr.mxu0 0.0
    %843 = vmatpush1.msra.mxu0 0.0
    %844 = vmatprep.subr.mxu0 0.0
    %845 = vmatpush1.msra.mxu0 0.0
    %846 = vmatprep.subr.mxu0 0.0
    %847 = vmatpush1.msra.mxu0 0.0
    %848 = vmatprep.subr.mxu0 0.0
    %849 = vmatpush1.msra.mxu0 0.0
    %850 = vmatprep.subr.mxu0 0.0
    %851 = vmatpush1.msra.mxu0 0.0
    %852 = vmatprep.subr.mxu0 0.0
    %853 = vmatpush1.msra.mxu0 0.0
    %854 = vmatprep.mubr.f32.mxu0 0.0
    %855 = vmatmul.mubr.f32.gmra.mrb[0].mxu0 %v717
    %v856 = vpop.f32.mrb[0].mxu0
    %v857 = vadd.f32 0.0, %v856
    %v858 = vpop.f32.mrb[0].mxu0
    %v859 = vadd.f32 0.0, %v858
    %860 = vdwg.mxu0
    %v861 = vadd.f32 %v609, %v786
    %v862 = vadd.f32 %v611, %v788
    %v863 = vadd.f32 %v680, %v857
    %v864 = vadd.f32 %v682, %v859
    %v865 = vld [vmem:[%s43] sm:$0xf]
    %v867 = vlaneseq
    %v868 = vshrl.u32 %v867, 7
    %v869 = vsub.s32 0, %v868
    %v870 = vrot.slane %v865, %v869
    %v871 = vlaneseq
    %v872 = vshrl.u32 %v871, 7
    %v873 = vsub.s32 1, %v872
    %v874 = vrot.slane %v865, %v873
    %v875 = vlaneseq
    %v876 = vshrl.u32 %v875, 7
    %v877 = vsub.s32 2, %v876
    %v878 = vrot.slane %v865, %v877
    %v879 = vlaneseq
    %v880 = vshrl.u32 %v879, 7
    %v881 = vsub.s32 3, %v880
    %v882 = vrot.slane %v865, %v881
    %v887 = vadd.f32 %v861, %v870
    %v888 = vadd.f32 %v862, %v874
    %v889 = vadd.f32 %v863, %v878
    %v890 = vadd.f32 %v864, %v882
    %v891 = vmax.f32 %v887, 0.0
    %v892 = vmax.f32 %v888, 0.0
    %v893 = vmax.f32 %v889, 0.0
    %v894 = vmax.f32 %v890, 0.0
    %v895 = vld [vmem:[%s41] sm:$0xff]
    %v896 = vld [vmem:[%s41 + $0x8] sm:$0xff]
    %v897 = vld [vmem:[%s41 + $0x10] sm:$0xff]
    %v898 = vld [vmem:[%s41 + $0x18] sm:$0xff]
    %v899 = vld [vmem:[%s41 + $0x20] sm:$0xff]
    %v900 = vld [vmem:[%s41 + $0x28] sm:$0xff]
    %v901 = vld [vmem:[%s41 + $0x30] sm:$0xff]
    %v902 = vld [vmem:[%s41 + $0x38] sm:$0xff]
    %v903 = vld [vmem:[%s41 + $0x40] sm:$0xff]
    %v904 = vld [vmem:[%s41 + $0x48] sm:$0xff]
    %v905 = vld [vmem:[%s41 + $0x50] sm:$0xff]
    %v906 = vld [vmem:[%s41 + $0x58] sm:$0xff]
    %v907 = vld [vmem:[%s41 + $0x60] sm:$0xff]
    %v908 = vld [vmem:[%s41 + $0x68] sm:$0xff]
    %v909 = vld [vmem:[%s41 + $0x70] sm:$0xff]
    %v910 = vld [vmem:[%s41 + $0x78] sm:$0xff]
    %v911 = vld [vmem:[%s41 + $0x80] sm:$0xff]
    %v912 = vld [vmem:[%s41 + $0x88] sm:$0xff]
    %v913 = vld [vmem:[%s41 + $0x90] sm:$0xff]
    %v914 = vld [vmem:[%s41 + $0x98] sm:$0xff]
    %v915 = vld [vmem:[%s41 + $0xa0] sm:$0xff]
    %v916 = vld [vmem:[%s41 + $0xa8] sm:$0xff]
    %v917 = vld [vmem:[%s41 + $0xb0] sm:$0xff]
    %v918 = vld [vmem:[%s41 + $0xb8] sm:$0xff]
    %v919 = vld [vmem:[%s41 + $0xc0] sm:$0xff]
    %v920 = vld [vmem:[%s41 + $0xc8] sm:$0xff]
    %v921 = vld [vmem:[%s41 + $0xd0] sm:$0xff]
    %v922 = vld [vmem:[%s41 + $0xd8] sm:$0xff]
    %v923 = vld [vmem:[%s41 + $0xe0] sm:$0xff]
    %v924 = vld [vmem:[%s41 + $0xe8] sm:$0xff]
    %v925 = vld [vmem:[%s41 + $0xf0] sm:$0xff]
    %v926 = vld [vmem:[%s41 + $0xf8] sm:$0xff]
    %v927 = vld [vmem:[%s41 + $0x100] sm:$0xff]
    %v928 = vld [vmem:[%s41 + $0x108] sm:$0xff]
    %v929 = vld [vmem:[%s41 + $0x110] sm:$0xff]
    %v930 = vld [vmem:[%s41 + $0x118] sm:$0xff]
    %v931 = vld [vmem:[%s41 + $0x120] sm:$0xff]
    %v932 = vld [vmem:[%s41 + $0x128] sm:$0xff]
    %v933 = vld [vmem:[%s41 + $0x130] sm:$0xff]
    %v934 = vld [vmem:[%s41 + $0x138] sm:$0xff]
    %v935 = vld [vmem:[%s41 + $0x140] sm:$0xff]
    %v936 = vld [vmem:[%s41 + $0x148] sm:$0xff]
    %v937 = vld [vmem:[%s41 + $0x150] sm:$0xff]
    %v938 = vld [vmem:[%s41 + $0x158] sm:$0xff]
    %v939 = vld [vmem:[%s41 + $0x160] sm:$0xff]
    %v940 = vld [vmem:[%s41 + $0x168] sm:$0xff]
    %v941 = vld [vmem:[%s41 + $0x170] sm:$0xff]
    %v942 = vld [vmem:[%s41 + $0x178] sm:$0xff]
    %v943 = vld [vmem:[%s41 + $0x180] sm:$0xff]
    %v944 = vld [vmem:[%s41 + $0x188] sm:$0xff]
    %v945 = vld [vmem:[%s41 + $0x190] sm:$0xff]
    %v946 = vld [vmem:[%s41 + $0x198] sm:$0xff]
    %v947 = vld [vmem:[%s41 + $0x1a0] sm:$0xff]
    %v948 = vld [vmem:[%s41 + $0x1a8] sm:$0xff]
    %v949 = vld [vmem:[%s41 + $0x1b0] sm:$0xff]
    %v950 = vld [vmem:[%s41 + $0x1b8] sm:$0xff]
    %v951 = vld [vmem:[%s41 + $0x1c0] sm:$0xff]
    %v952 = vld [vmem:[%s41 + $0x1c8] sm:$0xff]
    %v953 = vld [vmem:[%s41 + $0x1d0] sm:$0xff]
    %v954 = vld [vmem:[%s41 + $0x1d8] sm:$0xff]
    %v955 = vld [vmem:[%s41 + $0x1e0] sm:$0xff]
    %v956 = vld [vmem:[%s41 + $0x1e8] sm:$0xff]
    %v957 = vld [vmem:[%s41 + $0x1f0] sm:$0xff]
    %v958 = vld [vmem:[%s41 + $0x1f8] sm:$0xff]
    %v959 = vld [vmem:[%s47] sm:$0x1]
    %v961 = vlaneseq
    %v962 = vshrl.u32 %v961, 7
    %v963 = vsub.s32 0, %v962
    %v964 = vrot.slane %v959, %v963
    %966 = vmatprep.subr.mxu0 0.0
    %967 = vmatpush1.msra.mxu0 %v895
    %968 = vmatprep.subr.mxu0 0.0
    %969 = vmatpush1.msra.mxu0 %v896
    %970 = vmatprep.subr.mxu0 0.0
    %971 = vmatpush1.msra.mxu0 %v897
    %972 = vmatprep.subr.mxu0 0.0
    %973 = vmatpush1.msra.mxu0 %v898
    %974 = vmatprep.subr.mxu0 0.0
    %975 = vmatpush1.msra.mxu0 %v899
    %976 = vmatprep.subr.mxu0 0.0
    %977 = vmatpush1.msra.mxu0 %v900
    %978 = vmatprep.subr.mxu0 0.0
    %979 = vmatpush1.msra.mxu0 %v901
    %980 = vmatprep.subr.mxu0 0.0
    %981 = vmatpush1.msra.mxu0 %v902
    %982 = vmatprep.subr.mxu0 0.0
    %983 = vmatpush1.msra.mxu0 %v903
    %984 = vmatprep.subr.mxu0 0.0
    %985 = vmatpush1.msra.mxu0 %v904
    %986 = vmatprep.subr.mxu0 0.0
    %987 = vmatpush1.msra.mxu0 %v905
    %988 = vmatprep.subr.mxu0 0.0
    %989 = vmatpush1.msra.mxu0 %v906
    %990 = vmatprep.subr.mxu0 0.0
    %991 = vmatpush1.msra.mxu0 %v907
    %992 = vmatprep.subr.mxu0 0.0
    %993 = vmatpush1.msra.mxu0 %v908
    %994 = vmatprep.subr.mxu0 0.0
    %995 = vmatpush1.msra.mxu0 %v909
    %996 = vmatprep.subr.mxu0 0.0
    %997 = vmatpush1.msra.mxu0 %v910
    %998 = vmatprep.subr.mxu0 0.0
    %999 = vmatpush1.msra.mxu0 %v911
    %1000 = vmatprep.subr.mxu0 0.0
    %1001 = vmatpush1.msra.mxu0 %v912
    %1002 = vmatprep.subr.mxu0 0.0
    %1003 = vmatpush1.msra.mxu0 %v913
    %1004 = vmatprep.subr.mxu0 0.0
    %1005 = vmatpush1.msra.mxu0 %v914
    %1006 = vmatprep.subr.mxu0 0.0
    %1007 = vmatpush1.msra.mxu0 %v915
    %1008 = vmatprep.subr.mxu0 0.0
    %1009 = vmatpush1.msra.mxu0 %v916
    %1010 = vmatprep.subr.mxu0 0.0
    %1011 = vmatpush1.msra.mxu0 %v917
    %1012 = vmatprep.subr.mxu0 0.0
    %1013 = vmatpush1.msra.mxu0 %v918
    %1014 = vmatprep.subr.mxu0 0.0
    %1015 = vmatpush1.msra.mxu0 %v919
    %1016 = vmatprep.subr.mxu0 0.0
    %1017 = vmatpush1.msra.mxu0 %v920
    %1018 = vmatprep.subr.mxu0 0.0
    %1019 = vmatpush1.msra.mxu0 %v921
    %1020 = vmatprep.subr.mxu0 0.0
    %1021 = vmatpush1.msra.mxu0 %v922
    %1022 = vmatprep.subr.mxu0 0.0
    %1023 = vmatpush1.msra.mxu0 %v923
    %1024 = vmatprep.subr.mxu0 0.0
    %1025 = vmatpush1.msra.mxu0 %v924
    %1026 = vmatprep.subr.mxu0 0.0
    %1027 = vmatpush1.msra.mxu0 %v925
    %1028 = vmatprep.subr.mxu0 0.0
    %1029 = vmatpush1.msra.mxu0 %v926
    %1030 = vmatprep.mubr.f32.mxu0 %v892
    %1031 = vmatmul.mubr.f32.gmra.mrb[0].mxu0 %v891
    %v1032 = vpop.f32.mrb[0].mxu0
    %v1033 = vadd.f32 %v964, %v1032
    %v1034 = vpop.f32.mrb[0].mxu0
    %1035 = vdwg.mxu0
    %1036 = vmatprep.subr.mxu0 0.0
    %1037 = vmatpush1.msra.mxu0 %v927
    %1038 = vmatprep.subr.mxu0 0.0
    %1039 = vmatpush1.msra.mxu0 %v928
    %1040 = vmatprep.subr.mxu0 0.0
    %1041 = vmatpush1.msra.mxu0 %v929
    %1042 = vmatprep.subr.mxu0 0.0
    %1043 = vmatpush1.msra.mxu0 %v930
    %1044 = vmatprep.subr.mxu0 0.0
    %1045 = vmatpush1.msra.mxu0 %v931
    %1046 = vmatprep.subr.mxu0 0.0
    %1047 = vmatpush1.msra.mxu0 %v932
    %1048 = vmatprep.subr.mxu0 0.0
    %1049 = vmatpush1.msra.mxu0 %v933
    %1050 = vmatprep.subr.mxu0 0.0
    %1051 = vmatpush1.msra.mxu0 %v934
    %1052 = vmatprep.subr.mxu0 0.0
    %1053 = vmatpush1.msra.mxu0 %v935
    %1054 = vmatprep.subr.mxu0 0.0
    %1055 = vmatpush1.msra.mxu0 %v936
    %1056 = vmatprep.subr.mxu0 0.0
    %1057 = vmatpush1.msra.mxu0 %v937
    %1058 = vmatprep.subr.mxu0 0.0
    %1059 = vmatpush1.msra.mxu0 %v938
    %1060 = vmatprep.subr.mxu0 0.0
    %1061 = vmatpush1.msra.mxu0 %v939
    %1062 = vmatprep.subr.mxu0 0.0
    %1063 = vmatpush1.msra.mxu0 %v940
    %1064 = vmatprep.subr.mxu0 0.0
    %1065 = vmatpush1.msra.mxu0 %v941
    %1066 = vmatprep.subr.mxu0 0.0
    %1067 = vmatpush1.msra.mxu0 %v942
    %1068 = vmatprep.subr.mxu0 0.0
    %1069 = vmatpush1.msra.mxu0 %v943
    %1070 = vmatprep.subr.mxu0 0.0
    %1071 = vmatpush1.msra.mxu0 %v944
    %1072 = vmatprep.subr.mxu0 0.0
    %1073 = vmatpush1.msra.mxu0 %v945
    %1074 = vmatprep.subr.mxu0 0.0
    %1075 = vmatpush1.msra.mxu0 %v946
    %1076 = vmatprep.subr.mxu0 0.0
    %1077 = vmatpush1.msra.mxu0 %v947
    %1078 = vmatprep.subr.mxu0 0.0
    %1079 = vmatpush1.msra.mxu0 %v948
    %1080 = vmatprep.subr.mxu0 0.0
    %1081 = vmatpush1.msra.mxu0 %v949
    %1082 = vmatprep.subr.mxu0 0.0
    %1083 = vmatpush1.msra.mxu0 %v950
    %1084 = vmatprep.subr.mxu0 0.0
    %1085 = vmatpush1.msra.mxu0 %v951
    %1086 = vmatprep.subr.mxu0 0.0
    %1087 = vmatpush1.msra.mxu0 %v952
    %1088 = vmatprep.subr.mxu0 0.0
    %1089 = vmatpush1.msra.mxu0 %v953
    %1090 = vmatprep.subr.mxu0 0.0
    %1091 = vmatpush1.msra.mxu0 %v954
    %1092 = vmatprep.subr.mxu0 0.0
    %1093 = vmatpush1.msra.mxu0 %v955
    %1094 = vmatprep.subr.mxu0 0.0
    %1095 = vmatpush1.msra.mxu0 %v956
    %1096 = vmatprep.subr.mxu0 0.0
    %1097 = vmatpush1.msra.mxu0 %v957
    %1098 = vmatprep.subr.mxu0 0.0
    %1099 = vmatpush1.msra.mxu0 %v958
    %1100 = vmatprep.mubr.f32.mxu0 %v894
    %1101 = vmatmul.mubr.f32.gmra.mrb[0].mxu0 %v893
    %v1102 = vpop.f32.mrb[0].mxu0
    %v1103 = vadd.f32 %v1033, %v1102
    %v1104 = vpop.f32.mrb[0].mxu0
    %1105 = vdwg.mxu0
    %v1106 = vld [vmem:[%s39] sm:$0xff]
    %v1107 = vld [vmem:[%s39 + $0x8] sm:$0xff]
    %v1108 = vld [vmem:[%s39 + $0x10] sm:$0xff]
    %v1109 = vld [vmem:[%s39 + $0x18] sm:$0xff]
    %v1110 = vld [vmem:[%s39 + $0x20] sm:$0xff]
    %v1111 = vld [vmem:[%s39 + $0x28] sm:$0xff]
    %v1112 = vld [vmem:[%s39 + $0x30] sm:$0xff]
    %v1113 = vld [vmem:[%s39 + $0x38] sm:$0xff]
    %v1114 = vld [vmem:[%s39 + $0x40] sm:$0xff]
    %v1115 = vld [vmem:[%s39 + $0x48] sm:$0xff]
    %v1116 = vld [vmem:[%s39 + $0x50] sm:$0xff]
    %v1117 = vld [vmem:[%s39 + $0x58] sm:$0xff]
    %v1118 = vld [vmem:[%s39 + $0x60] sm:$0xff]
    %v1119 = vld [vmem:[%s39 + $0x68] sm:$0xff]
    %v1120 = vld [vmem:[%s39 + $0x70] sm:$0xff]
    %v1121 = vld [vmem:[%s39 + $0x78] sm:$0xff]
    %v1122 = vld [vmem:[%s39 + $0x80] sm:$0xff]
    %v1123 = vld [vmem:[%s39 + $0x88] sm:$0xff]
    %v1124 = vld [vmem:[%s39 + $0x90] sm:$0xff]
    %v1125 = vld [vmem:[%s39 + $0x98] sm:$0xff]
    %v1126 = vld [vmem:[%s39 + $0xa0] sm:$0xff]
    %v1127 = vld [vmem:[%s39 + $0xa8] sm:$0xff]
    %v1128 = vld [vmem:[%s39 + $0xb0] sm:$0xff]
    %v1129 = vld [vmem:[%s39 + $0xb8] sm:$0xff]
    %v1130 = vld [vmem:[%s39 + $0xc0] sm:$0xff]
    %v1131 = vld [vmem:[%s39 + $0xc8] sm:$0xff]
    %v1132 = vld [vmem:[%s39 + $0xd0] sm:$0xff]
    %v1133 = vld [vmem:[%s39 + $0xd8] sm:$0xff]
    %v1134 = vld [vmem:[%s39 + $0xe0] sm:$0xff]
    %v1135 = vld [vmem:[%s39 + $0xe8] sm:$0xff]
    %v1136 = vld [vmem:[%s39 + $0xf0] sm:$0xff]
    %v1137 = vld [vmem:[%s39 + $0xf8] sm:$0xff]
    %v1138 = vld [vmem:[%s45] sm:$0xf]
    %v1140 = vlaneseq
    %v1141 = vshrl.u32 %v1140, 7
    %v1142 = vsub.s32 0, %v1141
    %v1143 = vrot.slane %v1138, %v1142
    %v1144 = vlaneseq
    %v1145 = vshrl.u32 %v1144, 7
    %v1146 = vsub.s32 1, %v1145
    %v1147 = vrot.slane %v1138, %v1146
    %v1148 = vlaneseq
    %v1149 = vshrl.u32 %v1148, 7
    %v1150 = vsub.s32 2, %v1149
    %v1151 = vrot.slane %v1138, %v1150
    %v1152 = vlaneseq
    %v1153 = vshrl.u32 %v1152, 7
    %v1154 = vsub.s32 3, %v1153
    %v1155 = vrot.slane %v1138, %v1154
    %v1161 = vsel %vm141, %v216, 0
    %1163 = vmatprep.subr.mxu0 %v1107
    %1164 = vmatpush1.msra.mxu0 %v1106
    %1165 = vmatprep.subr.mxu0 %v1111
    %1166 = vmatpush1.msra.mxu0 %v1110
    %1167 = vmatprep.subr.mxu0 %v1115
    %1168 = vmatpush1.msra.mxu0 %v1114
    %1169 = vmatprep.subr.mxu0 %v1119
    %1170 = vmatpush1.msra.mxu0 %v1118
    %1171 = vmatprep.subr.mxu0 %v1123
    %1172 = vmatpush1.msra.mxu0 %v1122
    %1173 = vmatprep.subr.mxu0 %v1127
    %1174 = vmatpush1.msra.mxu0 %v1126
    %1175 = vmatprep.subr.mxu0 %v1131
    %1176 = vmatpush1.msra.mxu0 %v1130
    %1177 = vmatprep.subr.mxu0 %v1135
    %1178 = vmatpush1.msra.mxu0 %v1134
    %1179 = vmatprep.subr.mxu0 0.0
    %1180 = vmatpush1.msra.mxu0 0.0
    %1181 = vmatprep.subr.mxu0 0.0
    %1182 = vmatpush1.msra.mxu0 0.0
    %1183 = vmatprep.subr.mxu0 0.0
    %1184 = vmatpush1.msra.mxu0 0.0
    %1185 = vmatprep.subr.mxu0 0.0
    %1186 = vmatpush1.msra.mxu0 0.0
    %1187 = vmatprep.subr.mxu0 0.0
    %1188 = vmatpush1.msra.mxu0 0.0
    %1189 = vmatprep.subr.mxu0 0.0
    %1190 = vmatpush1.msra.mxu0 0.0
    %1191 = vmatprep.subr.mxu0 0.0
    %1192 = vmatpush1.msra.mxu0 0.0
    %1193 = vmatprep.subr.mxu0 0.0
    %1194 = vmatpush1.msra.mxu0 0.0
    %1195 = vmatprep.subr.mxu0 0.0
    %1196 = vmatpush1.msra.mxu0 0.0
    %1197 = vmatprep.subr.mxu0 0.0
    %1198 = vmatpush1.msra.mxu0 0.0
    %1199 = vmatprep.subr.mxu0 0.0
    %1200 = vmatpush1.msra.mxu0 0.0
    %1201 = vmatprep.subr.mxu0 0.0
    %1202 = vmatpush1.msra.mxu0 0.0
    %1203 = vmatprep.subr.mxu0 0.0
    %1204 = vmatpush1.msra.mxu0 0.0
    %1205 = vmatprep.subr.mxu0 0.0
    %1206 = vmatpush1.msra.mxu0 0.0
    %1207 = vmatprep.subr.mxu0 0.0
    %1208 = vmatpush1.msra.mxu0 0.0
    %1209 = vmatprep.subr.mxu0 0.0
    %1210 = vmatpush1.msra.mxu0 0.0
    %1211 = vmatprep.subr.mxu0 0.0
    %1212 = vmatpush1.msra.mxu0 0.0
    %1213 = vmatprep.subr.mxu0 0.0
    %1214 = vmatpush1.msra.mxu0 0.0
    %1215 = vmatprep.subr.mxu0 0.0
    %1216 = vmatpush1.msra.mxu0 0.0
    %1217 = vmatprep.subr.mxu0 0.0
    %1218 = vmatpush1.msra.mxu0 0.0
    %1219 = vmatprep.subr.mxu0 0.0
    %1220 = vmatpush1.msra.mxu0 0.0
    %1221 = vmatprep.subr.mxu0 0.0
    %1222 = vmatpush1.msra.mxu0 0.0
    %1223 = vmatprep.subr.mxu0 0.0
    %1224 = vmatpush1.msra.mxu0 0.0
    %1225 = vmatprep.subr.mxu0 0.0
    %1226 = vmatpush1.msra.mxu0 0.0
    %1227 = vmatprep.mubr.f32.mxu0 0.0
    %1228 = vmatmul.mubr.f32.gmra.mrb[0].mxu0 %v1161
    %v1229 = vpop.f32.mrb[0].mxu0
    %v1230 = vadd.f32 %v1143, %v1229
    %v1231 = vpop.f32.mrb[0].mxu0
    %v1232 = vadd.f32 %v1147, %v1231
    %1233 = vdwg.mxu0
    %1234 = vmatprep.subr.mxu0 %v1109
    %1235 = vmatpush1.msra.mxu0 %v1108
    %1236 = vmatprep.subr.mxu0 %v1113
    %1237 = vmatpush1.msra.mxu0 %v1112
    %1238 = vmatprep.subr.mxu0 %v1117
    %1239 = vmatpush1.msra.mxu0 %v1116
    %1240 = vmatprep.subr.mxu0 %v1121
    %1241 = vmatpush1.msra.mxu0 %v1120
    %1242 = vmatprep.subr.mxu0 %v1125
    %1243 = vmatpush1.msra.mxu0 %v1124
    %1244 = vmatprep.subr.mxu0 %v1129
    %1245 = vmatpush1.msra.mxu0 %v1128
    %1246 = vmatprep.subr.mxu0 %v1133
    %1247 = vmatpush1.msra.mxu0 %v1132
    %1248 = vmatprep.subr.mxu0 %v1137
    %1249 = vmatpush1.msra.mxu0 %v1136
    %1250 = vmatprep.subr.mxu0 0.0
    %1251 = vmatpush1.msra.mxu0 0.0
    %1252 = vmatprep.subr.mxu0 0.0
    %1253 = vmatpush1.msra.mxu0 0.0
    %1254 = vmatprep.subr.mxu0 0.0
    %1255 = vmatpush1.msra.mxu0 0.0
    %1256 = vmatprep.subr.mxu0 0.0
    %1257 = vmatpush1.msra.mxu0 0.0
    %1258 = vmatprep.subr.mxu0 0.0
    %1259 = vmatpush1.msra.mxu0 0.0
    %1260 = vmatprep.subr.mxu0 0.0
    %1261 = vmatpush1.msra.mxu0 0.0
    %1262 = vmatprep.subr.mxu0 0.0
    %1263 = vmatpush1.msra.mxu0 0.0
    %1264 = vmatprep.subr.mxu0 0.0
    %1265 = vmatpush1.msra.mxu0 0.0
    %1266 = vmatprep.subr.mxu0 0.0
    %1267 = vmatpush1.msra.mxu0 0.0
    %1268 = vmatprep.subr.mxu0 0.0
    %1269 = vmatpush1.msra.mxu0 0.0
    %1270 = vmatprep.subr.mxu0 0.0
    %1271 = vmatpush1.msra.mxu0 0.0
    %1272 = vmatprep.subr.mxu0 0.0
    %1273 = vmatpush1.msra.mxu0 0.0
    %1274 = vmatprep.subr.mxu0 0.0
    %1275 = vmatpush1.msra.mxu0 0.0
    %1276 = vmatprep.subr.mxu0 0.0
    %1277 = vmatpush1.msra.mxu0 0.0
    %1278 = vmatprep.subr.mxu0 0.0
    %1279 = vmatpush1.msra.mxu0 0.0
    %1280 = vmatprep.subr.mxu0 0.0
    %1281 = vmatpush1.msra.mxu0 0.0
    %1282 = vmatprep.subr.mxu0 0.0
    %1283 = vmatpush1.msra.mxu0 0.0
    %1284 = vmatprep.subr.mxu0 0.0
    %1285 = vmatpush1.msra.mxu0 0.0
    %1286 = vmatprep.subr.mxu0 0.0
    %1287 = vmatpush1.msra.mxu0 0.0
    %1288 = vmatprep.subr.mxu0 0.0
    %1289 = vmatpush1.msra.mxu0 0.0
    %1290 = vmatprep.subr.mxu0 0.0
    %1291 = vmatpush1.msra.mxu0 0.0
    %1292 = vmatprep.subr.mxu0 0.0
    %1293 = vmatpush1.msra.mxu0 0.0
    %1294 = vmatprep.subr.mxu0 0.0
    %1295 = vmatpush1.msra.mxu0 0.0
    %1296 = vmatprep.subr.mxu0 0.0
    %1297 = vmatpush1.msra.mxu0 0.0
    %1298 = vmatprep.mubr.f32.mxu0 0.0
    %1299 = vmatmul.mubr.f32.gmra.mrb[0].mxu0 %v1161
    %v1300 = vpop.f32.mrb[0].mxu0
    %v1301 = vadd.f32 %v1151, %v1300
    %v1302 = vpop.f32.mrb[0].mxu0
    %v1303 = vadd.f32 %v1155, %v1302
    %1304 = vdwg.mxu0
    %v1305 = vmax.f32 %v1230, 0.0
    %v1306 = vmax.f32 %v1232, 0.0
    %v1307 = vmax.f32 %v1301, 0.0
    %v1308 = vmax.f32 %v1303, 0.0
    %1309 = vmatprep.subr.mxu0 0.0
    %1310 = vmatpush1.msra.mxu0 %v895
    %1311 = vmatprep.subr.mxu0 0.0
    %1312 = vmatpush1.msra.mxu0 %v896
    %1313 = vmatprep.subr.mxu0 0.0
    %1314 = vmatpush1.msra.mxu0 %v897
    %1315 = vmatprep.subr.mxu0 0.0
    %1316 = vmatpush1.msra.mxu0 %v898
    %1317 = vmatprep.subr.mxu0 0.0
    %1318 = vmatpush1.msra.mxu0 %v899
    %1319 = vmatprep.subr.mxu0 0.0
    %1320 = vmatpush1.msra.mxu0 %v900
    %1321 = vmatprep.subr.mxu0 0.0
    %1322 = vmatpush1.msra.mxu0 %v901
    %1323 = vmatprep.subr.mxu0 0.0
    %1324 = vmatpush1.msra.mxu0 %v902
    %1325 = vmatprep.subr.mxu0 0.0
    %1326 = vmatpush1.msra.mxu0 %v903
    %1327 = vmatprep.subr.mxu0 0.0
    %1328 = vmatpush1.msra.mxu0 %v904
    %1329 = vmatprep.subr.mxu0 0.0
    %1330 = vmatpush1.msra.mxu0 %v905
    %1331 = vmatprep.subr.mxu0 0.0
    %1332 = vmatpush1.msra.mxu0 %v906
    %1333 = vmatprep.subr.mxu0 0.0
    %1334 = vmatpush1.msra.mxu0 %v907
    %1335 = vmatprep.subr.mxu0 0.0
    %1336 = vmatpush1.msra.mxu0 %v908
    %1337 = vmatprep.subr.mxu0 0.0
    %1338 = vmatpush1.msra.mxu0 %v909
    %1339 = vmatprep.subr.mxu0 0.0
    %1340 = vmatpush1.msra.mxu0 %v910
    %1341 = vmatprep.subr.mxu0 0.0
    %1342 = vmatpush1.msra.mxu0 %v911
    %1343 = vmatprep.subr.mxu0 0.0
    %1344 = vmatpush1.msra.mxu0 %v912
    %1345 = vmatprep.subr.mxu0 0.0
    %1346 = vmatpush1.msra.mxu0 %v913
    %1347 = vmatprep.subr.mxu0 0.0
    %1348 = vmatpush1.msra.mxu0 %v914
    %1349 = vmatprep.subr.mxu0 0.0
    %1350 = vmatpush1.msra.mxu0 %v915
    %1351 = vmatprep.subr.mxu0 0.0
    %1352 = vmatpush1.msra.mxu0 %v916
    %1353 = vmatprep.subr.mxu0 0.0
    %1354 = vmatpush1.msra.mxu0 %v917
    %1355 = vmatprep.subr.mxu0 0.0
    %1356 = vmatpush1.msra.mxu0 %v918
    %1357 = vmatprep.subr.mxu0 0.0
    %1358 = vmatpush1.msra.mxu0 %v919
    %1359 = vmatprep.subr.mxu0 0.0
    %1360 = vmatpush1.msra.mxu0 %v920
    %1361 = vmatprep.subr.mxu0 0.0
    %1362 = vmatpush1.msra.mxu0 %v921
    %1363 = vmatprep.subr.mxu0 0.0
    %1364 = vmatpush1.msra.mxu0 %v922
    %1365 = vmatprep.subr.mxu0 0.0
    %1366 = vmatpush1.msra.mxu0 %v923
    %1367 = vmatprep.subr.mxu0 0.0
    %1368 = vmatpush1.msra.mxu0 %v924
    %1369 = vmatprep.subr.mxu0 0.0
    %1370 = vmatpush1.msra.mxu0 %v925
    %1371 = vmatprep.subr.mxu0 0.0
    %1372 = vmatpush1.msra.mxu0 %v926
    %1373 = vmatprep.mubr.f32.mxu0 %v1306
    %1374 = vmatmul.mubr.f32.gmra.mrb[0].mxu0 %v1305
    %v1375 = vpop.f32.mrb[0].mxu0
    %v1376 = vadd.f32 %v964, %v1375
    %v1377 = vpop.f32.mrb[0].mxu0
    %1378 = vdwg.mxu0
    %1379 = vmatprep.subr.mxu0 0.0
    %1380 = vmatpush1.msra.mxu0 %v927
    %1381 = vmatprep.subr.mxu0 0.0
    %1382 = vmatpush1.msra.mxu0 %v928
    %1383 = vmatprep.subr.mxu0 0.0
    %1384 = vmatpush1.msra.mxu0 %v929
    %1385 = vmatprep.subr.mxu0 0.0
    %1386 = vmatpush1.msra.mxu0 %v930
    %1387 = vmatprep.subr.mxu0 0.0
    %1388 = vmatpush1.msra.mxu0 %v931
    %1389 = vmatprep.subr.mxu0 0.0
    %1390 = vmatpush1.msra.mxu0 %v932
    %1391 = vmatprep.subr.mxu0 0.0
    %1392 = vmatpush1.msra.mxu0 %v933
    %1393 = vmatprep.subr.mxu0 0.0
    %1394 = vmatpush1.msra.mxu0 %v934
    %1395 = vmatprep.subr.mxu0 0.0
    %1396 = vmatpush1.msra.mxu0 %v935
    %1397 = vmatprep.subr.mxu0 0.0
    %1398 = vmatpush1.msra.mxu0 %v936
    %1399 = vmatprep.subr.mxu0 0.0
    %1400 = vmatpush1.msra.mxu0 %v937
    %1401 = vmatprep.subr.mxu0 0.0
    %1402 = vmatpush1.msra.mxu0 %v938
    %1403 = vmatprep.subr.mxu0 0.0
    %1404 = vmatpush1.msra.mxu0 %v939
    %1405 = vmatprep.subr.mxu0 0.0
    %1406 = vmatpush1.msra.mxu0 %v940
    %1407 = vmatprep.subr.mxu0 0.0
    %1408 = vmatpush1.msra.mxu0 %v941
    %1409 = vmatprep.subr.mxu0 0.0
    %1410 = vmatpush1.msra.mxu0 %v942
    %1411 = vmatprep.subr.mxu0 0.0
    %1412 = vmatpush1.msra.mxu0 %v943
    %1413 = vmatprep.subr.mxu0 0.0
    %1414 = vmatpush1.msra.mxu0 %v944
    %1415 = vmatprep.subr.mxu0 0.0
    %1416 = vmatpush1.msra.mxu0 %v945
    %1417 = vmatprep.subr.mxu0 0.0
    %1418 = vmatpush1.msra.mxu0 %v946
    %1419 = vmatprep.subr.mxu0 0.0
    %1420 = vmatpush1.msra.mxu0 %v947
    %1421 = vmatprep.subr.mxu0 0.0
    %1422 = vmatpush1.msra.mxu0 %v948
    %1423 = vmatprep.subr.mxu0 0.0
    %1424 = vmatpush1.msra.mxu0 %v949
    %1425 = vmatprep.subr.mxu0 0.0
    %1426 = vmatpush1.msra.mxu0 %v950
    %1427 = vmatprep.subr.mxu0 0.0
    %1428 = vmatpush1.msra.mxu0 %v951
    %1429 = vmatprep.subr.mxu0 0.0
    %1430 = vmatpush1.msra.mxu0 %v952
    %1431 = vmatprep.subr.mxu0 0.0
    %1432 = vmatpush1.msra.mxu0 %v953
    %1433 = vmatprep.subr.mxu0 0.0
    %1434 = vmatpush1.msra.mxu0 %v954
    %1435 = vmatprep.subr.mxu0 0.0
    %1436 = vmatpush1.msra.mxu0 %v955
    %1437 = vmatprep.subr.mxu0 0.0
    %1438 = vmatpush1.msra.mxu0 %v956
    %1439 = vmatprep.subr.mxu0 0.0
    %1440 = vmatpush1.msra.mxu0 %v957
    %1441 = vmatprep.subr.mxu0 0.0
    %1442 = vmatpush1.msra.mxu0 %v958
    %1443 = vmatprep.mubr.f32.mxu0 %v1308
    %1444 = vmatmul.mubr.f32.gmra.mrb[0].mxu0 %v1307
    %v1445 = vpop.f32.mrb[0].mxu0
    %v1446 = vadd.f32 %v1376, %v1445
    %v1447 = vpop.f32.mrb[0].mxu0
    %1448 = vdwg.mxu0
    %v1449 = vsub.f32 %v1103, %v153
    %v1450 = vmul.f32 %v1449, %v1449
    %1452 = vrot.lane.b32.xlu0 %v1450, 96
    %v1453 = vpop.permute.xlu0 %1452
    %v1455 = vadd.f32 %v1450, %v1453
    %v1456 = vrsqrt.pop %v1455
    %v1457 = vmul.f32 %v1455, %v1456
    %vm1458 = vcmp.eq.f32.partialorder %v1455, inf
    %v1459 = vsel %vm1458, %v1455, %v1457
    %vm1460 = vcmp.eq.f32.partialorder %v1455, 0.0
    %v1461 = vand.u32 %v1455, 2147483648
    %v1462 = vsel %vm1460, %v1461, %v1459
    %v1463 = vsel %vm230, %v1462, 0.0
    %1464 = vadd.xlane.f32.xlu0 %v1463
    %v1465 = vpop.xlane.xlu0 %1464
    %v1466 = vrot.slane %v1465, 4
    %v1467 = vadd.f32 %v1465, %v1466
    %v1468 = vrot.slane %v1467, 2
    %v1469 = vadd.f32 %v1467, %v1468
    %v1470 = vrot.slane %v1469, 1
    %v1471 = vadd.f32 %v1469, %v1470
    %v1472 = vmul.f32 %v1471, 0.5
    %vm1473 = vcmask 0
    %1474 = vst.msk [vmem:[#allocation21] sm:$0x1] %vm1473, %v1472
    %v1475 = vsub.f32 %v1446, %v216
    %v1476 = vmul.f32 %v1475, %v1475
    %1478 = vrot.lane.b32.xlu0 %v1476, 96
    %v1479 = vpop.permute.xlu0 %1478
    %v1481 = vadd.f32 %v1476, %v1479
    %v1482 = vrsqrt.pop %v1481
    %v1483 = vmul.f32 %v1481, %v1482
    %vm1484 = vcmp.eq.f32.partialorder %v1481, inf
    %v1485 = vsel %vm1484, %v1481, %v1483
    %vm1486 = vcmp.eq.f32.partialorder %v1481, 0.0
    %v1487 = vand.u32 %v1481, 2147483648
    %v1488 = vsel %vm1486, %v1487, %v1485
    %v1489 = vsel %vm230, %v1488, 0.0
    %1490 = vadd.xlane.f32.xlu0 %v1489
    %v1491 = vpop.xlane.xlu0 %1490
    %v1492 = vrot.slane %v1491, 4
    %v1493 = vadd.f32 %v1491, %v1492
    %v1494 = vrot.slane %v1493, 2
    %v1495 = vadd.f32 %v1493, %v1494
    %v1496 = vrot.slane %v1495, 1
    %v1497 = vadd.f32 %v1495, %v1496
    %v1498 = vmul.f32 %v1497, 0.5
    %1499 = vst.msk [vmem:[#allocation22] sm:$0x1] %vm1473, %v1498
    %v1500 = vmul.f32 %v146, %v153
    %1502 = vrot.lane.b32.xlu0 %v1500, 96
    %v1503 = vpop.permute.xlu0 %1502
    %v1505 = vsub.f32 %v1500, %v1503
    %1507 = vrot.lane.b32.xlu0 %v153, 96
    %v1508 = vpop.permute.xlu0 %1507
    %v1510 = vmul.f32 %v146, %v1508
    %1511 = vrot.lane.b32.xlu0 %v153, 32
    %v1512 = vpop.permute.xlu0 %1511
    %v1514 = vmul.f32 %v146, %v1512
    %1516 = vrot.lane.b32.xlu0 %v1514, 96
    %v1517 = vpop.permute.xlu0 %1516
    %v1519 = vadd.f32 %v1510, %v1517
    %1521 = vrot.lane.b32.xlu0 %v1519, 32
    %v1522 = vpop.permute.xlu0 %1521
    %v1524 = vsel %vm230, %v1505, %v1522
    %v1525 = vmul.f32 %v146, %v1103
    %1527 = vrot.lane.b32.xlu0 %v1525, 96
    %v1528 = vpop.permute.xlu0 %1527
    %v1530 = vsub.f32 %v1525, %v1528
    %1532 = vrot.lane.b32.xlu0 %v1103, 96
    %v1533 = vpop.permute.xlu0 %1532
    %v1535 = vmul.f32 %v146, %v1533
    %1536 = vrot.lane.b32.xlu0 %v1103, 32
    %v1537 = vpop.permute.xlu0 %1536
    %v1539 = vmul.f32 %v146, %v1537
    %1541 = vrot.lane.b32.xlu0 %v1539, 96
    %v1542 = vpop.permute.xlu0 %1541
    %v1544 = vadd.f32 %v1535, %v1542
    %1546 = vrot.lane.b32.xlu0 %v1544, 32
    %v1547 = vpop.permute.xlu0 %1546
    %v1549 = vsel %vm230, %v1530, %v1547
    %v1550 = vmul.f32 %v203, %v1446
    %1552 = vrot.lane.b32.xlu0 %v1550, 96
    %v1553 = vpop.permute.xlu0 %1552
    %v1555 = vsub.f32 %v1550, %v1553
    %1557 = vrot.lane.b32.xlu0 %v1446, 96
    %v1558 = vpop.permute.xlu0 %1557
    %v1560 = vmul.f32 %v203, %v1558
    %1561 = vrot.lane.b32.xlu0 %v1446, 32
    %v1562 = vpop.permute.xlu0 %1561
    %v1564 = vmul.f32 %v203, %v1562
    %1566 = vrot.lane.b32.xlu0 %v1564, 96
    %v1567 = vpop.permute.xlu0 %1566
    %v1569 = vadd.f32 %v1560, %v1567
    %1571 = vrot.lane.b32.xlu0 %v1569, 32
    %v1572 = vpop.permute.xlu0 %1571
    %v1574 = vsel %vm230, %v1555, %v1572
    %v1575 = vld [vmem:[%s29] sm:$0xff]
    %v1576 = vld [vmem:[%s29 + $0x8] sm:$0xff]
    %v1577 = vld [vmem:[%s29 + $0x10] sm:$0xff]
    %v1578 = vld [vmem:[%s29 + $0x18] sm:$0xff]
    %v1579 = vld [vmem:[%s29 + $0x20] sm:$0xff]
    %v1580 = vld [vmem:[%s29 + $0x28] sm:$0xff]
    %v1581 = vld [vmem:[%s29 + $0x30] sm:$0xff]
    %v1582 = vld [vmem:[%s29 + $0x38] sm:$0xff]
    %v1583 = vld [vmem:[%s29 + $0x40] sm:$0xff]
    %v1584 = vld [vmem:[%s29 + $0x48] sm:$0xff]
    %v1585 = vld [vmem:[%s29 + $0x50] sm:$0xff]
    %v1586 = vld [vmem:[%s29 + $0x58] sm:$0xff]
    %v1587 = vld [vmem:[%s29 + $0x60] sm:$0xff]
    %v1588 = vld [vmem:[%s29 + $0x68] sm:$0xff]
    %v1589 = vld [vmem:[%s29 + $0x70] sm:$0xff]
    %v1590 = vld [vmem:[%s29 + $0x78] sm:$0xff]
    %v1591 = vld [vmem:[%s29 + $0x80] sm:$0xff]
    %v1592 = vld [vmem:[%s29 + $0x88] sm:$0xff]
    %v1593 = vld [vmem:[%s29 + $0x90] sm:$0xff]
    %v1594 = vld [vmem:[%s29 + $0x98] sm:$0xff]
    %v1595 = vld [vmem:[%s29 + $0xa0] sm:$0xff]
    %v1596 = vld [vmem:[%s29 + $0xa8] sm:$0xff]
    %v1597 = vld [vmem:[%s29 + $0xb0] sm:$0xff]
    %v1598 = vld [vmem:[%s29 + $0xb8] sm:$0xff]
    %v1599 = vld [vmem:[%s29 + $0xc0] sm:$0xff]
    %v1600 = vld [vmem:[%s29 + $0xc8] sm:$0xff]
    %v1601 = vld [vmem:[%s29 + $0xd0] sm:$0xff]
    %v1602 = vld [vmem:[%s29 + $0xd8] sm:$0xff]
    %v1603 = vld [vmem:[%s29 + $0xe0] sm:$0xff]
    %v1604 = vld [vmem:[%s29 + $0xe8] sm:$0xff]
    %v1605 = vld [vmem:[%s29 + $0xf0] sm:$0xff]
    %v1606 = vld [vmem:[%s29 + $0xf8] sm:$0xff]
    %v1607 = vpack.c.bf16 %v1549, %v1524
    %v1608 = vpack.c.bf16 %v1574, %v1574
    %v1609 = vpack.c.bf16 %v1576, %v1575
    %v1610 = vpack.c.bf16 %v1578, %v1577
    %v1611 = vpack.c.bf16 %v1580, %v1579
    %v1612 = vpack.c.bf16 %v1582, %v1581
    %v1613 = vpack.c.bf16 %v1584, %v1583
    %v1614 = vpack.c.bf16 %v1586, %v1585
    %v1615 = vpack.c.bf16 %v1588, %v1587
    %v1616 = vpack.c.bf16 %v1590, %v1589
    %v1617 = vpack.c.bf16 %v1592, %v1591
    %v1618 = vpack.c.bf16 %v1594, %v1593
    %v1619 = vpack.c.bf16 %v1596, %v1595
    %v1620 = vpack.c.bf16 %v1598, %v1597
    %v1621 = vpack.c.bf16 %v1600, %v1599
    %v1622 = vpack.c.bf16 %v1602, %v1601
    %v1623 = vpack.c.bf16 %v1604, %v1603
    %v1624 = vpack.c.bf16 %v1606, %v1605
    %v1626 = vsel %vm141, %v1607, 0
    %v1629 = vsel %vm141, %v1608, 0
    %v1632 = vsel %vm141, %v1609, 0
    %v1635 = vsel %vm141, %v1610, 0
    %v1638 = vsel %vm141, %v1611, 0
    %v1641 = vsel %vm141, %v1612, 0
    %v1644 = vsel %vm141, %v1613, 0
    %v1647 = vsel %vm141, %v1614, 0
    %v1650 = vsel %vm141, %v1615, 0
    %v1653 = vsel %vm141, %v1616, 0
    %v1656 = vsel %vm141, %v1617, 0
    %v1659 = vsel %vm141, %v1618, 0
    %v1662 = vsel %vm141, %v1619, 0
    %v1665 = vsel %vm141, %v1620, 0
    %v1668 = vsel %vm141, %v1621, 0
    %v1671 = vsel %vm141, %v1622, 0
    %v1674 = vsel %vm141, %v1623, 0
    %v1677 = vsel %vm141, %v1624, 0
    %1679 = vmatprep.subr.bf16.mxu0 0
    %1680 = vmatpush1.bf16.xpose.msra.mxu0 %v1632
    %1681 = vmatprep.subr.bf16.mxu0 0
    %1682 = vmatpush1.bf16.xpose.msra.mxu0 %v1635
    %1683 = vmatprep.subr.bf16.mxu0 0
    %1684 = vmatpush1.bf16.xpose.msra.mxu0 %v1638
    %1685 = vmatprep.subr.bf16.mxu0 0
    %1686 = vmatpush1.bf16.xpose.msra.mxu0 %v1641
    %1687 = vmatprep.subr.bf16.mxu0 0
    %1688 = vmatpush1.bf16.xpose.msra.mxu0 %v1644
    %1689 = vmatprep.subr.bf16.mxu0 0
    %1690 = vmatpush1.bf16.xpose.msra.mxu0 %v1647
    %1691 = vmatprep.subr.bf16.mxu0 0
    %1692 = vmatpush1.bf16.xpose.msra.mxu0 %v1650
    %1693 = vmatprep.subr.bf16.mxu0 0
    %1694 = vmatpush1.bf16.xpose.msra.mxu0 %v1653
    %1695 = vmatprep.subr.bf16.mxu0 0
    %1696 = vmatpush1.bf16.xpose.msra.mxu0 %v1656
    %1697 = vmatprep.subr.bf16.mxu0 0
    %1698 = vmatpush1.bf16.xpose.msra.mxu0 %v1659
    %1699 = vmatprep.subr.bf16.mxu0 0
    %1700 = vmatpush1.bf16.xpose.msra.mxu0 %v1662
    %1701 = vmatprep.subr.bf16.mxu0 0
    %1702 = vmatpush1.bf16.xpose.msra.mxu0 %v1665
    %1703 = vmatprep.subr.bf16.mxu0 0
    %1704 = vmatpush1.bf16.xpose.msra.mxu0 %v1668
    %1705 = vmatprep.subr.bf16.mxu0 0
    %1706 = vmatpush1.bf16.xpose.msra.mxu0 %v1671
    %1707 = vmatprep.subr.bf16.mxu0 0
    %1708 = vmatpush1.bf16.xpose.msra.mxu0 %v1674
    %1709 = vmatprep.subr.bf16.mxu0 0
    %1710 = vmatpush1.bf16.xpose.msra.mxu0 %v1677
    %1711 = vmatprep.mubr.bf16.mxu0 0
    %1712 = vmatmul.mubr.bf16.gmra.mrb[0].mxu0 %v1626
    %v1713 = vpop.f32.mrb[0].mxu0
    %v1714 = vadd.f32 0.0, %v1713
    %v1715 = vpop.f32.mrb[0].mxu0
    %v1716 = vadd.f32 0.0, %v1715
    %v1717 = vpop.f32.mrb[0].mxu0
    %v1718 = vadd.f32 0.0, %v1717
    %v1719 = vpop.f32.mrb[0].mxu0
    %v1720 = vadd.f32 0.0, %v1719
    %1721 = vmatprep.mubr.bf16.mxu0 0
    %1722 = vmatmul.mubr.bf16.gmra.mrb[0].mxu0 %v1629
    %v1723 = vpop.f32.mrb[0].mxu0
    %v1724 = vadd.f32 0.0, %v1723
    %v1725 = vpop.f32.mrb[0].mxu0
    %v1726 = vadd.f32 0.0, %v1725
    %v1727 = vpop.f32.mrb[0].mxu0
    %v1728 = vpop.f32.mrb[0].mxu0
    %1729 = vdwg.mxu0
    %v1730 = vpack.c.bf16 %v138, %v138
    %v1731 = vpack.c.bf16 %v196, %v196
    %v1733 = vsel %vm141, %v1730, 0
    %v1736 = vsel %vm141, %v1731, 0
    %1738 = vmatprep.subr.bf16.mxu0 0
    %1739 = vmatpush1.bf16.xpose.msra.mxu0 %v1632
    %1740 = vmatprep.subr.bf16.mxu0 0
    %1741 = vmatpush1.bf16.xpose.msra.mxu0 %v1635
    %1742 = vmatprep.subr.bf16.mxu0 0
    %1743 = vmatpush1.bf16.xpose.msra.mxu0 %v1638
    %1744 = vmatprep.subr.bf16.mxu0 0
    %1745 = vmatpush1.bf16.xpose.msra.mxu0 %v1641
    %1746 = vmatprep.subr.bf16.mxu0 0
    %1747 = vmatpush1.bf16.xpose.msra.mxu0 %v1644
    %1748 = vmatprep.subr.bf16.mxu0 0
    %1749 = vmatpush1.bf16.xpose.msra.mxu0 %v1647
    %1750 = vmatprep.subr.bf16.mxu0 0
    %1751 = vmatpush1.bf16.xpose.msra.mxu0 %v1650
    %1752 = vmatprep.subr.bf16.mxu0 0
    %1753 = vmatpush1.bf16.xpose.msra.mxu0 %v1653
    %1754 = vmatprep.subr.bf16.mxu0 0
    %1755 = vmatpush1.bf16.xpose.msra.mxu0 %v1656
    %1756 = vmatprep.subr.bf16.mxu0 0
    %1757 = vmatpush1.bf16.xpose.msra.mxu0 %v1659
    %1758 = vmatprep.subr.bf16.mxu0 0
    %1759 = vmatpush1.bf16.xpose.msra.mxu0 %v1662
    %1760 = vmatprep.subr.bf16.mxu0 0
    %1761 = vmatpush1.bf16.xpose.msra.mxu0 %v1665
    %1762 = vmatprep.subr.bf16.mxu0 0
    %1763 = vmatpush1.bf16.xpose.msra.mxu0 %v1668
    %1764 = vmatprep.subr.bf16.mxu0 0
    %1765 = vmatpush1.bf16.xpose.msra.mxu0 %v1671
    %1766 = vmatprep.subr.bf16.mxu0 0
    %1767 = vmatpush1.bf16.xpose.msra.mxu0 %v1674
    %1768 = vmatprep.subr.bf16.mxu0 0
    %1769 = vmatpush1.bf16.xpose.msra.mxu0 %v1677
    %1770 = vmatprep.mubr.bf16.mxu0 0
    %1771 = vmatmul.mubr.bf16.gmra.mrb[0].mxu0 %v1733
    %v1772 = vpop.f32.mrb[0].mxu0
    %v1773 = vadd.f32 0.0, %v1772
    %v1774 = vpop.f32.mrb[0].mxu0
    %v1775 = vadd.f32 0.0, %v1774
    %v1776 = vpop.f32.mrb[0].mxu0
    %v1777 = vadd.f32 0.0, %v1776
    %v1778 = vpop.f32.mrb[0].mxu0
    %v1779 = vadd.f32 0.0, %v1778
    %1780 = vmatprep.mubr.bf16.mxu0 0
    %1781 = vmatmul.mubr.bf16.gmra.mrb[0].mxu0 %v1736
    %v1782 = vpop.f32.mrb[0].mxu0
    %v1783 = vadd.f32 0.0, %v1782
    %v1784 = vpop.f32.mrb[0].mxu0
    %v1785 = vadd.f32 0.0, %v1784
    %v1786 = vpop.f32.mrb[0].mxu0
    %v1787 = vpop.f32.mrb[0].mxu0
    %1788 = vdwg.mxu0
    %v1789 = vmul.f32 %v1524, %v138
    %v1790 = vmul.f32 %v1549, %v138
    %v1791 = vmul.f32 %v1574, %v196
    %v1792 = vsel %vm141, %v1789, 0.0
    %1793 = vadd.xlane.f32.xlu0 %v1792
    %v1794 = vpop.xlane.xlu0 %1793
    %v1795 = vsel %vm141, %v1790, 0.0
    %1796 = vadd.xlane.f32.xlu0 %v1795
    %v1797 = vpop.xlane.xlu0 %1796
    %v1798 = vsel %vm141, %v1791, 0.0
    %1799 = vadd.xlane.f32.xlu0 %v1798
    %v1800 = vpop.xlane.xlu0 %1799
    %v1801 = vmul.f32 %v1773, %v1794
    %v1802 = vmul.f32 %v1775, %v1794
    %v1803 = vmul.f32 %v1777, %v1797
    %v1804 = vmul.f32 %v1779, %v1797
    %v1805 = vmul.f32 %v1783, %v1800
    %v1806 = vmul.f32 %v1785, %v1800
    %v1807 = vsub.f32 %v1714, %v1801
    %v1808 = vsub.f32 %v1716, %v1802
    %v1809 = vsub.f32 %v1718, %v1803
    %v1810 = vsub.f32 %v1720, %v1804
    %v1811 = vsub.f32 %v1724, %v1805
    %v1812 = vsub.f32 %v1726, %v1806
    %1813 = vst [vmem:[#allocation2] sm:$0xff] %v1807
    %1814 = vst [vmem:[#allocation2 + $0x8] sm:$0xff] %v1808
    %1815 = vst [vmem:[#allocation4] sm:$0xff] %v1809
    %1816 = vst [vmem:[#allocation4 + $0x8] sm:$0xff] %v1810
    %1817 = vst [vmem:[#allocation6] sm:$0xff] %v1811
    %1818 = vst [vmem:[#allocation6 + $0x8] sm:$0xff] %v1812
    %v1819 = vld [vmem:[%s25] sm:$0xff]
    %v1820 = vmul.f32 %v1819, %v1819
    %v1821 = vsel %vm141, %v1820, 0.0
    %1822 = vadd.xlane.f32.xlu0 %v1821
    %v1823 = vpop.xlane.xlu0 %1822
    %v1824 = vrsqrt.pop %v1823
    %v1825 = vmul.f32 %v1823, %v1824
    %vm1826 = vcmp.eq.f32.partialorder %v1823, inf
    %v1827 = vsel %vm1826, %v1823, %v1825
    %vm1828 = vcmp.eq.f32.partialorder %v1823, 0.0
    %v1829 = vand.u32 %v1823, 2147483648
    %v1830 = vsel %vm1828, %v1829, %v1827
    %v1831 = vmax.f32 %v1830, 1e-12
    %v1832 = vrcp.pop %v1831
    %v1833 = vmul.f32 %v1819, %v1832
    %v1834 = vld [vmem:[%s27] sm:$0xff]
    %v1835 = vmul.f32 %v1833, %v1834
    %1837 = vrot.lane.b32.xlu0 %v1835, 96
    %v1838 = vpop.permute.xlu0 %1837
    %v1840 = vsub.f32 %v1835, %v1838
    %1842 = vrot.lane.b32.xlu0 %v1834, 96
    %v1843 = vpop.permute.xlu0 %1842
    %v1845 = vmul.f32 %v1833, %v1843
    %1846 = vrot.lane.b32.xlu0 %v1834, 32
    %v1847 = vpop.permute.xlu0 %1846
    %v1849 = vmul.f32 %v1833, %v1847
    %1851 = vrot.lane.b32.xlu0 %v1849, 96
    %v1852 = vpop.permute.xlu0 %1851
    %v1854 = vadd.f32 %v1845, %v1852
    %1856 = vrot.lane.b32.xlu0 %v1854, 32
    %v1857 = vpop.permute.xlu0 %1856
    %v1859 = vsel %vm230, %v1840, %v1857
    %v1860 = vpack.c.bf16 %v1859, %v1859
    %v1861 = vld [vmem:[%s31] sm:$0xff]
    %v1862 = vld [vmem:[%s31 + $0x8] sm:$0xff]
    %v1863 = vpack.c.bf16 %v1862, %v1861
    %v1865 = vsel %vm141, %v1860, 0
    %v1868 = vsel %vm141, %v1863, 0
    %1870 = vmatprep.subr.bf16.mxu0 0
    %1871 = vmatpush1.bf16.xpose.msra.mxu0 %v1868
    %1872 = vmatprep.subr.bf16.mxu0 0
    %1873 = vmatpush1.bf16.xpose.msra.mxu0 0
    %1874 = vmatprep.subr.bf16.mxu0 0
    %1875 = vmatpush1.bf16.xpose.msra.mxu0 0
    %1876 = vmatprep.subr.bf16.mxu0 0
    %1877 = vmatpush1.bf16.xpose.msra.mxu0 0
    %1878 = vmatprep.subr.bf16.mxu0 0
    %1879 = vmatpush1.bf16.xpose.msra.mxu0 0
    %1880 = vmatprep.subr.bf16.mxu0 0
    %1881 = vmatpush1.bf16.xpose.msra.mxu0 0
    %1882 = vmatprep.subr.bf16.mxu0 0
    %1883 = vmatpush1.bf16.xpose.msra.mxu0 0
    %1884 = vmatprep.subr.bf16.mxu0 0
    %1885 = vmatpush1.bf16.xpose.msra.mxu0 0
    %1886 = vmatprep.subr.bf16.mxu0 0
    %1887 = vmatpush1.bf16.xpose.msra.mxu0 0
    %1888 = vmatprep.subr.bf16.mxu0 0
    %1889 = vmatpush1.bf16.xpose.msra.mxu0 0
    %1890 = vmatprep.subr.bf16.mxu0 0
    %1891 = vmatpush1.bf16.xpose.msra.mxu0 0
    %1892 = vmatprep.subr.bf16.mxu0 0
    %1893 = vmatpush1.bf16.xpose.msra.mxu0 0
    %1894 = vmatprep.subr.bf16.mxu0 0
    %1895 = vmatpush1.bf16.xpose.msra.mxu0 0
    %1896 = vmatprep.subr.bf16.mxu0 0
    %1897 = vmatpush1.bf16.xpose.msra.mxu0 0
    %1898 = vmatprep.subr.bf16.mxu0 0
    %1899 = vmatpush1.bf16.xpose.msra.mxu0 0
    %1900 = vmatprep.subr.bf16.mxu0 0
    %1901 = vmatpush1.bf16.xpose.msra.mxu0 0
    %1902 = vmatprep.mubr.bf16.mxu0 0
    %1903 = vmatmul.mubr.bf16.gmra.mrb[0].mxu0 %v1865
    %v1904 = vpop.f32.mrb[0].mxu0
    %v1905 = vadd.f32 0.0, %v1904
    %v1906 = vpop.f32.mrb[0].mxu0
    %v1907 = vpop.f32.mrb[0].mxu0
    %v1908 = vpop.f32.mrb[0].mxu0
    %1909 = vdwg.mxu0
    %vm1910 = vcmask 130048
    %1911 = vst.msk [vmem:[#allocation7] sm:$0xff] %vm1910, %v1905
    // Predicated region
    $region98: #{forward.1} parent=1 // pred_check
      _
    $region99: #{forward.1} parent=1 // pred_check_branch
      %1913 = sbr.rel (0) target = $region101
    $region100: #{forward.1} parent=1 // pred_region
      %s1915 = ssub.s32 256, 256
      %1916 = vsyncadd [#allocation3], %s1915
      %s1918 = sshll.u32 [#allocation2], 4
      %s1919 = int_to_ptr.vmem [resolvable:$true] %s1918
      %1921 = dma.vmem_to_hbm [thread:$0]  %s1919, 256, %s49, [#allocation3]
    $region101: #{forward.1} parent=1 // pred_fallthru
      _
    // Predicated region
    $region102: #{forward.1} parent=1 // pred_check
      _
    $region103: #{forward.1} parent=1 // pred_check_branch
      %1923 = sbr.rel (0) target = $region105
    $region104: #{forward.1} parent=1 // pred_region
      %s1925 = ssub.s32 256, 256
      %1926 = vsyncadd [#allocation5], %s1925
      %s1928 = sshll.u32 [#allocation4], 4
      %s1929 = int_to_ptr.vmem [resolvable:$true] %s1928
      %1931 = dma.vmem_to_hbm [thread:$0]  %s1929, 256, %s51, [#allocation5]
    $region105: #{forward.1} parent=1 // pred_fallthru
      _
    // Predicated region
    $region106: #{forward.1} parent=1 // pred_check
      _
    $region107: #{forward.1} parent=1 // pred_check_branch
      %1933 = sbr.rel (0) target = $region109
    $region108: #{forward.1} parent=1 // pred_region
      %s1935 = ssub.s32 256, 256
      %1936 = vsyncadd [#allocation5], %s1935
      %s1938 = sshll.u32 [#allocation6], 4
      %s1939 = int_to_ptr.vmem [resolvable:$true] %s1938
      %1941 = dma.vmem_to_hbm [thread:$0]  %s1939, 256, %s53, [#allocation5]
    $region109: #{forward.1} parent=1 // pred_fallthru
      _
    // Predicated region
    $region110: #{forward.1} parent=1 // pred_check
      _
    $region111: #{forward.1} parent=1 // pred_check_branch
      %1943 = sbr.rel (0) target = $region113
    $region112: #{forward.1} parent=1 // pred_region
      %s1945 = ssub.s32 128, 128
      %1946 = vsyncadd [#allocation8], %s1945
      %s1948 = sshll.u32 [#allocation7], 4
      %s1949 = int_to_ptr.vmem [resolvable:$true] %s1948
      %1951 = dma.vmem_to_hbm [thread:$0]  %s1949, 128, %s55, [#allocation8]
    $region113: #{forward.1} parent=1 // pred_fallthru
      _
    // Predicated region
    $region114: #{forward.1} parent=1 // pred_check
      _
    $region115: #{forward.1} parent=1 // pred_check_branch
      %1953 = sbr.rel (0) target = $region117
    $region116: #{forward.1} parent=1 // pred_region
      %s1955 = ssub.s32 128, 128
      %1956 = vsyncadd [#allocation8], %s1955
      %s1958 = sshll.u32 [#allocation9], 4
      %s1959 = int_to_ptr.vmem [resolvable:$true] %s1958
      %1961 = dma.vmem_to_hbm [thread:$0]  %s1959, 128, %s57, [#allocation8]
    $region117: #{forward.1} parent=1 // pred_fallthru
      _
    // Predicated region
    $region118: #{forward.1} parent=1 // pred_check
      _
    $region119: #{forward.1} parent=1 // pred_check_branch
      %1963 = sbr.rel (0) target = $region121
    $region120: #{forward.1} parent=1 // pred_region
      %s1965 = ssub.s32 128, 128
      %1966 = vsyncadd [#allocation11], %s1965
      %s1968 = sshll.u32 [#allocation10], 4
      %s1969 = int_to_ptr.vmem [resolvable:$true] %s1968
      %1971 = dma.vmem_to_hbm [thread:$0]  %s1969, 128, %s59, [#allocation11]
    $region121: #{forward.1} parent=1 // pred_fallthru
      _
    // Predicated region
    $region122: #{forward.1} parent=1 // pred_check
      _
    $region123: #{forward.1} parent=1 // pred_check_branch
      %1973 = sbr.rel (0) target = $region125
    $region124: #{forward.1} parent=1 // pred_region
      %s1975 = ssub.s32 128, 128
      %1976 = vsyncadd [#allocation11], %s1975
      %s1978 = sshll.u32 [#allocation12], 4
      %s1979 = int_to_ptr.vmem [resolvable:$true] %s1978
      %1981 = dma.vmem_to_hbm [thread:$0]  %s1979, 128, %s61, [#allocation11]
    $region125: #{forward.1} parent=1 // pred_fallthru
      _
    // Predicated region
    $region126: #{forward.1} parent=1 // pred_check
      _
    $region127: #{forward.1} parent=1 // pred_check_branch
      %1983 = sbr.rel (0) target = $region129
    $region128: #{forward.1} parent=1 // pred_region
      %s1985 = ssub.s32 128, 128
      %1986 = vsyncadd [#allocation14], %s1985
      %s1988 = sshll.u32 [#allocation13], 4
      %s1989 = int_to_ptr.vmem [resolvable:$true] %s1988
      %1991 = dma.vmem_to_hbm [thread:$0]  %s1989, 128, %s63, [#allocation14]
    $region129: #{forward.1} parent=1 // pred_fallthru
      _
    // Predicated region
    $region130: #{forward.1} parent=1 // pred_check
      _
    $region131: #{forward.1} parent=1 // pred_check_branch
      %1993 = sbr.rel (0) target = $region133
    $region132: #{forward.1} parent=1 // pred_region
      %s1995 = ssub.s32 128, 128
      %1996 = vsyncadd [#allocation14], %s1995
      %s1998 = sshll.u32 [#allocation15], 4
      %s1999 = int_to_ptr.vmem [resolvable:$true] %s1998
      %2001 = dma.vmem_to_hbm [thread:$0]  %s1999, 128, %s65, [#allocation14]
    $region133: #{forward.1} parent=1 // pred_fallthru
      _
    // Predicated region
    $region134: #{forward.1} parent=1 // pred_check
      _
    $region135: #{forward.1} parent=1 // pred_check_branch
      %2003 = sbr.rel (0) target = $region137
    $region136: #{forward.1} parent=1 // pred_region
      %s2005 = ssub.s32 128, 128
      %2006 = vsyncadd [#allocation17], %s2005
      %s2008 = sshll.u32 [#allocation16], 4
      %s2009 = int_to_ptr.vmem [resolvable:$true] %s2008
      %2011 = dma.vmem_to_hbm [thread:$0]  %s2009, 128, %s67, [#allocation17]
    $region137: #{forward.1} parent=1 // pred_fallthru
      _
    // Predicated region
    $region138: #{forward.1} parent=1 // pred_check
      _
    $region139: #{forward.1} parent=1 // pred_check_branch
      %2013 = sbr.rel (0) target = $region141
    $region140: #{forward.1} parent=1 // pred_region
      %s2015 = ssub.s32 128, 128
      %2016 = vsyncadd [#allocation17], %s2015
      %s2018 = sshll.u32 [#allocation18], 4
      %s2019 = int_to_ptr.vmem [resolvable:$true] %s2018
      %2021 = dma.vmem_to_hbm [thread:$0]  %s2019, 128, %s69, [#allocation17]
    $region141: #{forward.1} parent=1 // pred_fallthru
      _
    // Predicated region
    $region142: #{forward.1} parent=1 // pred_check
      _
    $region143: #{forward.1} parent=1 // pred_check_branch
      %2023 = sbr.rel (0) target = $region145
    $region144: #{forward.1} parent=1 // pred_region
      %s2025 = ssub.s32 128, 128
      %2026 = vsyncadd [#allocation20], %s2025
      %s2028 = sshll.u32 [#allocation19], 4
      %s2029 = int_to_ptr.vmem [resolvable:$true] %s2028
      %2031 = dma.vmem_to_hbm [thread:$0]  %s2029, 128, %s71, [#allocation20]
    $region145: #{forward.1} parent=1 // pred_fallthru
      _
    // Predicated region
    $region146: #{forward.1} parent=1 // pred_check
      _
    $region147: #{forward.1} parent=1 // pred_check_branch
      %2033 = sbr.rel (0) target = $region149
    $region148: #{forward.1} parent=1 // pred_region
      %s2035 = ssub.s32 16, 16
      %2036 = vsyncadd [#allocation20], %s2035
      %s2038 = sshll.u32 [#allocation21], 4
      %s2039 = int_to_ptr.vmem [resolvable:$true] %s2038
      %2041 = dma.vmem_to_hbm [thread:$0]  %s2039, 16, %s73, [#allocation20]
    $region149: #{forward.1} parent=1 // pred_fallthru
      _
    // Predicated region
    $region150: #{forward.1} parent=1 // pred_check
      _
    $region151: #{forward.1} parent=1 // pred_check_branch
      %2043 = sbr.rel (0) target = $region153
    $region152: #{forward.1} parent=1 // pred_region
      %s2045 = ssub.s32 16, 16
      %2046 = vsyncadd [#allocation23], %s2045
      %s2048 = sshll.u32 [#allocation22], 4
      %s2049 = int_to_ptr.vmem [resolvable:$true] %s2048
      %2051 = dma.vmem_to_hbm [thread:$0]  %s2049, 16, %s75, [#allocation23]
    $region153: #{forward.1} parent=1 // pred_fallthru
      _
    // Predicated region
    $region154: #{forward.1} parent=1 // pred_check
      _
    $region155: #{forward.1} parent=1 // pred_check_branch
      %2053 = sbr.rel (0) target = $region157
    $region156: #{forward.1} parent=1 // pred_region
      %2054 = dma.done [#allocation3], 256
    $region157: #{forward.1} parent=1 // pred_fallthru
      _
    // Predicated region
    $region158: #{forward.1} parent=1 // pred_check
      _
    $region159: #{forward.1} parent=1 // pred_check_branch
      %2056 = sbr.rel (0) target = $region161
    $region160: #{forward.1} parent=1 // pred_region
      %2057 = dma.done [#allocation5], 256
    $region161: #{forward.1} parent=1 // pred_fallthru
      _
    // Predicated region
    $region162: #{forward.1} parent=1 // pred_check
      _
    $region163: #{forward.1} parent=1 // pred_check_branch
      %2059 = sbr.rel (0) target = $region165
    $region164: #{forward.1} parent=1 // pred_region
      %2060 = dma.done [#allocation5], 256
    $region165: #{forward.1} parent=1 // pred_fallthru
      _
    // Predicated region
    $region166: #{forward.1} parent=1 // pred_check
      _
    $region167: #{forward.1} parent=1 // pred_check_branch
      %2062 = sbr.rel (0) target = $region169
    $region168: #{forward.1} parent=1 // pred_region
      %2063 = dma.done [#allocation8], 128
    $region169: #{forward.1} parent=1 // pred_fallthru
      _
    // Predicated region
    $region170: #{forward.1} parent=1 // pred_check
      _
    $region171: #{forward.1} parent=1 // pred_check_branch
      %2065 = sbr.rel (0) target = $region173
    $region172: #{forward.1} parent=1 // pred_region
      %2066 = dma.done [#allocation8], 128
    $region173: #{forward.1} parent=1 // pred_fallthru
      _
    // Predicated region
    $region174: #{forward.1} parent=1 // pred_check
      _
    $region175: #{forward.1} parent=1 // pred_check_branch
      %2068 = sbr.rel (0) target = $region177
    $region176: #{forward.1} parent=1 // pred_region
      %2069 = dma.done [#allocation11], 128
    $region177: #{forward.1} parent=1 // pred_fallthru
      _
    // Predicated region
    $region178: #{forward.1} parent=1 // pred_check
      _
    $region179: #{forward.1} parent=1 // pred_check_branch
      %2071 = sbr.rel (0) target = $region181
    $region180: #{forward.1} parent=1 // pred_region
      %2072 = dma.done [#allocation11], 128
    $region181: #{forward.1} parent=1 // pred_fallthru
      _
    // Predicated region
    $region182: #{forward.1} parent=1 // pred_check
      _
    $region183: #{forward.1} parent=1 // pred_check_branch
      %2074 = sbr.rel (0) target = $region185
    $region184: #{forward.1} parent=1 // pred_region
      %2075 = dma.done [#allocation14], 128
    $region185: #{forward.1} parent=1 // pred_fallthru
      _
    // Predicated region
    $region186: #{forward.1} parent=1 // pred_check
      _
    $region187: #{forward.1} parent=1 // pred_check_branch
      %2077 = sbr.rel (0) target = $region189
    $region188: #{forward.1} parent=1 // pred_region
      %2078 = dma.done [#allocation14], 128
    $region189: #{forward.1} parent=1 // pred_fallthru
      _
    // Predicated region
    $region190: #{forward.1} parent=1 // pred_check
      _
    $region191: #{forward.1} parent=1 // pred_check_branch
      %2080 = sbr.rel (0) target = $region193
    $region192: #{forward.1} parent=1 // pred_region
      %2081 = dma.done [#allocation17], 128
    $region193: #{forward.1} parent=1 // pred_fallthru
      _
    // Predicated region
    $region194: #{forward.1} parent=1 // pred_check
      _
    $region195: #{forward.1} parent=1 // pred_check_branch
      %2083 = sbr.rel (0) target = $region197
    $region196: #{forward.1} parent=1 // pred_region
      %2084 = dma.done [#allocation17], 128
    $region197: #{forward.1} parent=1 // pred_fallthru
      _
    // Predicated region
    $region198: #{forward.1} parent=1 // pred_check
      _
    $region199: #{forward.1} parent=1 // pred_check_branch
      %2086 = sbr.rel (0) target = $region201
    $region200: #{forward.1} parent=1 // pred_region
      %2087 = dma.done [#allocation20], 128
    $region201: #{forward.1} parent=1 // pred_fallthru
      _
    // Predicated region
    $region202: #{forward.1} parent=1 // pred_check
      _
    $region203: #{forward.1} parent=1 // pred_check_branch
      %2089 = sbr.rel (0) target = $region205
    $region204: #{forward.1} parent=1 // pred_region
      %2090 = dma.done [#allocation20], 16
    $region205: #{forward.1} parent=1 // pred_fallthru
      _
    // Predicated region
    $region206: #{forward.1} parent=1 // pred_check
      _
    $region207: #{forward.1} parent=1 // pred_check_branch
      %2092 = sbr.rel (0) target = $region209
    $region208: #{forward.1} parent=1 // pred_region
      %2093 = dma.done [#allocation23], 16
    $region209: #{forward.1} parent=1 // pred_fallthru
      _
    %2094 = vsyncpa [#allocation3], 1
    %2095 = vsyncpa [#allocation5], 1
    %2096 = vsyncpa [#allocation8], 1
    %2097 = vsyncpa [#allocation11], 1
    %2098 = vsyncpa [#allocation14], 1
    %2099 = vsyncpa [#allocation17], 1
    %2100 = vsyncpa [#allocation20], 1
    %2101 = vsyncpa [#allocation23], 1

</llo_original>
